<compile_context>
chip_gen: v7x
topology: tpu7x:2x2x1
jax: 0.10.0
libtpu: 0.0.40
codegen_flags: <defaults>
</compile_context>

<pallas_src>
import jax
import jax.numpy as jnp
from jax.experimental import pallas as pl
from jax.experimental.pallas import tpu as pltpu


def lstm_recurrent_kernel(gx_ref, h0_ref, c0_ref, wh_ref,
                          hseq_ref, hN_ref, cN_ref,
                          h_scr, c_scr):
    """One grid step == TT LSTM timesteps for one batch tile.

    gx_ref:   (TT, B_tile, 4H)  precomputed x@Wx + b gate pre-activations.
    wh_ref:   (H, 4H)           recurrent weight, VMEM-resident for the grid.
    hseq_ref: (1, B_tile, TT*H) lane-dense packed stacked-hidden output block.
    h/c are carried across time blocks in VMEM scratch.
    """
    tb = pl.program_id(1)          # time-block index (serial axis)
    TT = gx_ref.shape[0]
    H = h0_ref.shape[1]

    @pl.when(tb == 0)
    def _init():
        h_scr[...] = h0_ref[...].astype(jnp.float32)
        c_scr[...] = c0_ref[...].astype(jnp.float32)

    h = h_scr[...]
    c = c_scr[...]
    wh = wh_ref[...]

    # Static unroll over the TT timesteps of this block: all slice offsets are
    # compile-time constants and the scheduler sees straight-line code.
    for tt in range(TT):
        gates = gx_ref[tt].astype(jnp.float32) + jnp.dot(
            h, wh, preferred_element_type=jnp.float32)
        # torch.chunk order: candidate | forget | input | output
        candidate = gates[:, 0 * H:1 * H]
        forget = gates[:, 1 * H:2 * H]
        input_g = gates[:, 2 * H:3 * H]
        output = gates[:, 3 * H:4 * H]

        c = jax.nn.sigmoid(forget) * c + jax.nn.sigmoid(input_g) * jnp.tanh(candidate)
        h = jax.nn.sigmoid(output) * jnp.tanh(c)

        # Pack this step's hidden state into the lane-dense output block.
        hseq_ref[0, :, pl.ds(tt * H, H)] = h.astype(hseq_ref.dtype)

    # Carry for the next time block (stays in VMEM).
    h_scr[...] = h
    c_scr[...] = c

    # Final states: written only on the last time block.
    @pl.when(tb == pl.num_programs(1) - 1)
    def _finalize():
        hN_ref[...] = h.astype(hN_ref.dtype)
        cN_ref[...] = c.astype(cN_ref.dtype)


def lstm_pallas(x, h0, c0, w, b):
    """Full-sequence LSTM forward.

    Args:
      x:  (B, T, D) inputs.
      h0: (B, H) initial hidden state.
      c0: (B, H) initial cell state.
      w:  (D+H, 4H) weight (PyTorch Linear weight, transposed).
      b:  (4H,) bias.

    Returns:
      (stacked_hidden (B, T, H), (h_T (B, H), c_T (B, H)))
    """
    B, T, D = x.shape
    H = h0.shape[1]
    assert w.shape == (D + H, 4 * H)
    assert b.shape == (4 * H,)

    # ---- Hoisted, batched input projection (one big matmul, full MXU) -----
    # Emitted directly time-major so no standalone x transpose is needed.
    wx = w[:D]            # (D, 4H)   non-recurrent weight
    wh = w[D:]            # (H, 4H)   recurrent weight (only this stays resident)
    gx = jnp.einsum('btd,dg->tbg', x, wx) + b       # (T, B, 4H)

    # Pad batch to the f32 sublane tile (8).
    B_TILE = 8
    B_pad = ((B + B_TILE - 1) // B_TILE) * B_TILE
    pad = B_pad - B
    if pad:
        gx = jnp.pad(gx, ((0, 0), (0, pad), (0, 0)))
        h0 = jnp.pad(h0, ((0, pad), (0, 0)))
        c0 = jnp.pad(c0, ((0, pad), (0, 0)))

    # Timesteps per grid step: amortizes per-step pipeline overhead and makes
    # the stacked-hidden writeback lane-dense (last dim TT*H).
    TT = 1
    for cand in (32, 16, 8, 4, 2, 1):
        if T % cand == 0:
            TT = cand
            break
    n_bt = B_pad // B_TILE
    n_tb = T // TT

    out_shape = (
        jax.ShapeDtypeStruct((n_tb, B_pad, TT * H), x.dtype),  # packed hseq
        jax.ShapeDtypeStruct((B_pad, H), x.dtype),             # final hidden
        jax.ShapeDtypeStruct((B_pad, H), x.dtype),             # final cell
    )

    hseq, h_fin, c_fin = pl.pallas_call(
        lstm_recurrent_kernel,
        out_shape=out_shape,
        grid_spec=pltpu.PrefetchScalarGridSpec(
            num_scalar_prefetch=0,
            grid=(n_bt, n_tb),    # (independent batch tiles, serial time blocks)
            in_specs=[
                # Gate pre-activations for TT timesteps of this batch tile.
                pl.BlockSpec((TT, B_TILE, 4 * H), lambda bt, tb: (tb, bt, 0)),
                # h0/c0: read only at tb == 0.
                pl.BlockSpec((B_TILE, H), lambda bt, tb: (bt, 0)),
                pl.BlockSpec((B_TILE, H), lambda bt, tb: (bt, 0)),
                # Recurrent weight: constant index_map -> VMEM-resident.
                pl.BlockSpec((H, 4 * H), lambda bt, tb: (0, 0)),
            ],
            out_specs=(
                # Lane-dense packed hidden states: last dim TT*H.
                pl.BlockSpec((1, B_TILE, TT * H), lambda bt, tb: (tb, bt, 0)),
                pl.BlockSpec((B_TILE, H), lambda bt, tb: (bt, 0)),
                pl.BlockSpec((B_TILE, H), lambda bt, tb: (bt, 0)),
            ),
            scratch_shapes=[
                pltpu.VMEM((B_TILE, H), jnp.float32),   # h carry
                pltpu.VMEM((B_TILE, H), jnp.float32),   # c carry
            ],
        ),
        compiler_params=pltpu.CompilerParams(
            # Batch tiles are independent (megacore-parallel on v7x);
            # the time axis is a serial recurrence -> "arbitrary".
            dimension_semantics=("parallel", "arbitrary"),
        ),
    )(gx, h0, c0, wh)

    # Unpack (n_tb, B_pad, TT*H) -> (B, T, H).
    stacked = (hseq.reshape(n_tb, B_pad, TT, H)
                   .transpose(1, 0, 2, 3)
                   .reshape(B_pad, T, H))[:B]
    return stacked, (h_fin[:B], c_fin[:B])


def lstm_reference(x, h0, c0, w, b):
    """Pure-JAX reference matching the PyTorch LSTM module exactly."""
    B, T, D = x.shape
    H = h0.shape[1]
    h, c = h0, c0
    outs = []
    for t in range(T):
        combined = jnp.concatenate([x[:, t, :], h], axis=1)
        gates = combined @ w + b
        candidate, forget, input_g, output = jnp.split(gates, 4, axis=1)
        f_t = jax.nn.sigmoid(forget)
        i_t = jax.nn.sigmoid(input_g)
        c = f_t * c + i_t * jnp.tanh(candidate)
        h = jax.nn.sigmoid(output) * jnp.tanh(c)
        outs.append(h)
    return jnp.stack(outs, axis=1), (h, c)


if __name__ == "__main__":
    batch_size = 2
    seq_len = 8
    input_size = 16
    hidden_size = 32

    key = jax.random.PRNGKey(0)
    kx, kh, kc, kw, kb = jax.random.split(key, 5)

    x = jax.random.normal(kx, (batch_size, seq_len, input_size), dtype=jnp.float32)
    h0 = jax.random.normal(kh, (batch_size, hidden_size), dtype=jnp.float32)
    c0 = jax.random.normal(kc, (batch_size, hidden_size), dtype=jnp.float32)

    # nn.Linear(input_size + hidden_size, 4 * hidden_size) params,
    # PyTorch-style uniform(-1/sqrt(fan_in), 1/sqrt(fan_in)), stored transposed.
    fan_in = input_size + hidden_size
    bound = 1.0 / jnp.sqrt(jnp.float32(fan_in))
    w = jax.random.uniform(kw, (fan_in, 4 * hidden_size),
                           minval=-bound, maxval=bound, dtype=jnp.float32)
    b = jax.random.uniform(kb, (4 * hidden_size,),
                           minval=-bound, maxval=bound, dtype=jnp.float32)

    stacked, (h_fin, c_fin) = lstm_pallas(x, h0, c0, w, b)
    jax.block_until_ready((stacked, h_fin, c_fin))

    stacked_ref, (h_ref, c_ref) = lstm_reference(x, h0, c0, w, b)

    assert stacked.shape == (batch_size, seq_len, hidden_size)
    assert h_fin.shape == (batch_size, hidden_size)
    assert c_fin.shape == (batch_size, hidden_size)
    assert jnp.allclose(stacked, stacked_ref, atol=1e-4, rtol=1e-4)
    assert jnp.allclose(h_fin, h_ref, atol=1e-4, rtol=1e-4)
    assert jnp.allclose(c_fin, c_ref, atol=1e-4, rtol=1e-4)

    print("KERNEL_OK")
</pallas_src>

<mosaic_0001>
module attributes {stable_mosaic.version = 11 : i64} {
  func.func @lstm_recurrent_kernel(%arg0: i32, %arg1: i32, %arg2: memref<8x8x128xf32, #tpu.memory_space<vmem>>, %arg3: memref<8x32xf32, #tpu.memory_space<vmem>>, %arg4: memref<8x32xf32, #tpu.memory_space<vmem>>, %arg5: memref<32x128xf32, #tpu.memory_space<vmem>>, %arg6: memref<1x8x256xf32, #tpu.memory_space<vmem>>, %arg7: memref<8x32xf32, #tpu.memory_space<vmem>>, %arg8: memref<8x32xf32, #tpu.memory_space<vmem>>, %arg9: memref<8x32xf32, #tpu.memory_space<vmem>>, %arg10: memref<8x32xf32, #tpu.memory_space<vmem>>) attributes {dimension_semantics = [#tpu.dimension_semantics<parallel>, #tpu.dimension_semantics<arbitrary>], iteration_bounds = array<i64: 1, 1>, scalar_prefetch = 0 : i64, scratch_operands = 2 : i64, tpu.core_type = #tpu.core_type<tc>, window_params = [{transform_indices = @transform_0, window_bounds = array<i64: 8, 8, 128>}, {transform_indices = @transform_1, window_bounds = array<i64: 8, 32>}, {transform_indices = @transform_2, window_bounds = array<i64: 8, 32>}, {pipeline_mode = #tpu.pipeline_mode<synchronous>, transform_indices = @transform_3, window_bounds = array<i64: 32, 128>}, {transform_indices = @transform_4, window_bounds = array<i64: 1, 8, 256>}, {transform_indices = @transform_5, window_bounds = array<i64: 8, 32>}, {transform_indices = @transform_6, window_bounds = array<i64: 8, 32>}]} {
    %c0_i32 = arith.constant 0 : i32
    %0 = arith.cmpi eq, %arg1, %c0_i32 : i32
    %1 = arith.extui %0 : i1 to i32
    %c0_i32_0 = arith.constant 0 : i32
    %2 = arith.cmpi ne, %1, %c0_i32_0 : i32
    scf.if %2 {
      %c0_77 = arith.constant 0 : index
      %c0_78 = arith.constant 0 : index
      %267 = vector.load %arg3[%c0_77, %c0_78] : memref<8x32xf32, #tpu.memory_space<vmem>>, vector<8x32xf32>
      %c0_79 = arith.constant 0 : index
      %c0_80 = arith.constant 0 : index
      %268 = vector.load %arg9[%c0_79, %c0_80] : memref<8x32xf32, #tpu.memory_space<vmem>>, vector<8x32xf32>
      tpu.vector_store %arg9[%c0_79, %c0_80], %267 {strides = array<i32>} : memref<8x32xf32, #tpu.memory_space<vmem>>, vector<8x32xf32>,
      %c0_81 = arith.constant 0 : index
      %c0_82 = arith.constant 0 : index
      %269 = vector.load %arg4[%c0_81, %c0_82] : memref<8x32xf32, #tpu.memory_space<vmem>>, vector<8x32xf32>
      %c0_83 = arith.constant 0 : index
      %c0_84 = arith.constant 0 : index
      %270 = vector.load %arg10[%c0_83, %c0_84] : memref<8x32xf32, #tpu.memory_space<vmem>>, vector<8x32xf32>
      tpu.vector_store %arg10[%c0_83, %c0_84], %269 {strides = array<i32>} : memref<8x32xf32, #tpu.memory_space<vmem>>, vector<8x32xf32>,
    } else {
    }
    %c0 = arith.constant 0 : index
    %c0_1 = arith.constant 0 : index
    %3 = vector.load %arg9[%c0, %c0_1] : memref<8x32xf32, #tpu.memory_space<vmem>>, vector<8x32xf32>
    %c0_2 = arith.constant 0 : index
    %c0_3 = arith.constant 0 : index
    %4 = vector.load %arg10[%c0_2, %c0_3] : memref<8x32xf32, #tpu.memory_space<vmem>>, vector<8x32xf32>
    %c0_4 = arith.constant 0 : index
    %c0_5 = arith.constant 0 : index
    %5 = vector.load %arg5[%c0_4, %c0_5] : memref<32x128xf32, #tpu.memory_space<vmem>>, vector<32x128xf32>
    %c0_6 = arith.constant 0 : index
    %c0_7 = arith.constant 0 : index
    %c0_8 = arith.constant 0 : index
    %6 = vector.load %arg2[%c0_6, %c0_7, %c0_8] : memref<8x8x128xf32, #tpu.memory_space<vmem>>, vector<1x8x128xf32>
    %7 = vector.shape_cast %6 : vector<1x8x128xf32> to vector<8x128xf32>
    %cst = arith.constant dense<0.000000e+00> : vector<8x128xf32>
    %8 = tpu.matmul %3, %5, %cst {dimension_numbers = #tpu.dot_dimension_numbers<[1], [0], [0], [1], [0, 0, 1, 1], [], []>} : vector<8x32xf32>, vector<32x128xf32>, vector<8x128xf32> -> vector<8x128xf32>
    %9 = arith.addf %7, %8 : vector<8x128xf32>
    %10 = vector.extract_strided_slice %9 {offsets = [0, 0], sizes = [8, 32], strides = [1, 1]} : vector<8x128xf32> to vector<8x32xf32>
    %11 = vector.extract_strided_slice %9 {offsets = [0, 32], sizes = [8, 32], strides = [1, 1]} : vector<8x128xf32> to vector<8x32xf32>
    %12 = vector.extract_strided_slice %9 {offsets = [0, 64], sizes = [8, 32], strides = [1, 1]} : vector<8x128xf32> to vector<8x32xf32>
    %13 = vector.extract_strided_slice %9 {offsets = [0, 96], sizes = [8, 32], strides = [1, 1]} : vector<8x128xf32> to vector<8x32xf32>
    %14 = arith.negf %11 : vector<8x32xf32>
    %15 = math.exp %14 : vector<8x32xf32>
    %cst_9 = arith.constant 1.000000e+00 : f32
    %16 = vector.broadcast %cst_9 : f32 to vector<8x32xf32>
    %17 = arith.addf %16, %15 : vector<8x32xf32>
    %18 = arith.divf %16, %17 : vector<8x32xf32>
    %19 = arith.mulf %18, %4 : vector<8x32xf32>
    %20 = arith.negf %12 : vector<8x32xf32>
    %21 = math.exp %20 : vector<8x32xf32>
    %cst_10 = arith.constant 1.000000e+00 : f32
    %22 = vector.broadcast %cst_10 : f32 to vector<8x32xf32>
    %23 = arith.addf %22, %21 : vector<8x32xf32>
    %24 = arith.divf %22, %23 : vector<8x32xf32>
    %25 = math.tanh %10 : vector<8x32xf32>
    %26 = arith.mulf %24, %25 : vector<8x32xf32>
    %27 = arith.addf %19, %26 : vector<8x32xf32>
    %28 = arith.negf %13 : vector<8x32xf32>
    %29 = math.exp %28 : vector<8x32xf32>
    %cst_11 = arith.constant 1.000000e+00 : f32
    %30 = vector.broadcast %cst_11 : f32 to vector<8x32xf32>
    %31 = arith.addf %30, %29 : vector<8x32xf32>
    %32 = arith.divf %30, %31 : vector<8x32xf32>
    %33 = math.tanh %27 : vector<8x32xf32>
    %34 = arith.mulf %32, %33 : vector<8x32xf32>
    %c0_12 = arith.constant 0 : index
    %c0_13 = arith.constant 0 : index
    %c0_14 = arith.constant 0 : index
    %35 = vector.load %arg6[%c0_12, %c0_13, %c0_14] : memref<1x8x256xf32, #tpu.memory_space<vmem>>, vector<1x8x32xf32>
    %36 = vector.shape_cast %35 : vector<1x8x32xf32> to vector<8x32xf32>
    %37 = vector.shape_cast %34 : vector<8x32xf32> to vector<1x8x32xf32>
    tpu.vector_store %arg6[%c0_12, %c0_13, %c0_14], %37 {strides = array<i32>} : memref<1x8x256xf32, #tpu.memory_space<vmem>>, vector<1x8x32xf32>,
    %c1 = arith.constant 1 : index
    %c0_15 = arith.constant 0 : index
    %c0_16 = arith.constant 0 : index
    %38 = vector.load %arg2[%c1, %c0_15, %c0_16] : memref<8x8x128xf32, #tpu.memory_space<vmem>>, vector<1x8x128xf32>
    %39 = vector.shape_cast %38 : vector<1x8x128xf32> to vector<8x128xf32>
    %cst_17 = arith.constant dense<0.000000e+00> : vector<8x128xf32>
    %40 = tpu.matmul %34, %5, %cst_17 {dimension_numbers = #tpu.dot_dimension_numbers<[1], [0], [0], [1], [0, 0, 1, 1], [], []>} : vector<8x32xf32>, vector<32x128xf32>, vector<8x128xf32> -> vector<8x128xf32>
    %41 = arith.addf %39, %40 : vector<8x128xf32>
    %42 = vector.extract_strided_slice %41 {offsets = [0, 0], sizes = [8, 32], strides = [1, 1]} : vector<8x128xf32> to vector<8x32xf32>
    %43 = vector.extract_strided_slice %41 {offsets = [0, 32], sizes = [8, 32], strides = [1, 1]} : vector<8x128xf32> to vector<8x32xf32>
    %44 = vector.extract_strided_slice %41 {offsets = [0, 64], sizes = [8, 32], strides = [1, 1]} : vector<8x128xf32> to vector<8x32xf32>
    %45 = vector.extract_strided_slice %41 {offsets = [0, 96], sizes = [8, 32], strides = [1, 1]} : vector<8x128xf32> to vector<8x32xf32>
    %46 = arith.negf %43 : vector<8x32xf32>
    %47 = math.exp %46 : vector<8x32xf32>
    %cst_18 = arith.constant 1.000000e+00 : f32
    %48 = vector.broadcast %cst_18 : f32 to vector<8x32xf32>
    %49 = arith.addf %48, %47 : vector<8x32xf32>
    %50 = arith.divf %48, %49 : vector<8x32xf32>
    %51 = arith.mulf %50, %27 : vector<8x32xf32>
    %52 = arith.negf %44 : vector<8x32xf32>
    %53 = math.exp %52 : vector<8x32xf32>
    %cst_19 = arith.constant 1.000000e+00 : f32
    %54 = vector.broadcast %cst_19 : f32 to vector<8x32xf32>
    %55 = arith.addf %54, %53 : vector<8x32xf32>
    %56 = arith.divf %54, %55 : vector<8x32xf32>
    %57 = math.tanh %42 : vector<8x32xf32>
    %58 = arith.mulf %56, %57 : vector<8x32xf32>
    %59 = arith.addf %51, %58 : vector<8x32xf32>
    %60 = arith.negf %45 : vector<8x32xf32>
    %61 = math.exp %60 : vector<8x32xf32>
    %cst_20 = arith.constant 1.000000e+00 : f32
    %62 = vector.broadcast %cst_20 : f32 to vector<8x32xf32>
    %63 = arith.addf %62, %61 : vector<8x32xf32>
    %64 = arith.divf %62, %63 : vector<8x32xf32>
    %65 = math.tanh %59 : vector<8x32xf32>
    %66 = arith.mulf %64, %65 : vector<8x32xf32>
    %c0_21 = arith.constant 0 : index
    %c0_22 = arith.constant 0 : index
    %c32 = arith.constant 32 : index
    %67 = vector.load %arg6[%c0_21, %c0_22, %c32] : memref<1x8x256xf32, #tpu.memory_space<vmem>>, vector<1x8x32xf32>
    %68 = vector.shape_cast %67 : vector<1x8x32xf32> to vector<8x32xf32>
    %69 = vector.shape_cast %66 : vector<8x32xf32> to vector<1x8x32xf32>
    tpu.vector_store %arg6[%c0_21, %c0_22, %c32], %69 {strides = array<i32>} : memref<1x8x256xf32, #tpu.memory_space<vmem>>, vector<1x8x32xf32>,
    %c2 = arith.constant 2 : index
    %c0_23 = arith.constant 0 : index
    %c0_24 = arith.constant 0 : index
    %70 = vector.load %arg2[%c2, %c0_23, %c0_24] : memref<8x8x128xf32, #tpu.memory_space<vmem>>, vector<1x8x128xf32>
    %71 = vector.shape_cast %70 : vector<1x8x128xf32> to vector<8x128xf32>
    %cst_25 = arith.constant dense<0.000000e+00> : vector<8x128xf32>
    %72 = tpu.matmul %66, %5, %cst_25 {dimension_numbers = #tpu.dot_dimension_numbers<[1], [0], [0], [1], [0, 0, 1, 1], [], []>} : vector<8x32xf32>, vector<32x128xf32>, vector<8x128xf32> -> vector<8x128xf32>
    %73 = arith.addf %71, %72 : vector<8x128xf32>
    %74 = vector.extract_strided_slice %73 {offsets = [0, 0], sizes = [8, 32], strides = [1, 1]} : vector<8x128xf32> to vector<8x32xf32>
    %75 = vector.extract_strided_slice %73 {offsets = [0, 32], sizes = [8, 32], strides = [1, 1]} : vector<8x128xf32> to vector<8x32xf32>
    %76 = vector.extract_strided_slice %73 {offsets = [0, 64], sizes = [8, 32], strides = [1, 1]} : vector<8x128xf32> to vector<8x32xf32>
    %77 = vector.extract_strided_slice %73 {offsets = [0, 96], sizes = [8, 32], strides = [1, 1]} : vector<8x128xf32> to vector<8x32xf32>
    %78 = arith.negf %75 : vector<8x32xf32>
    %79 = math.exp %78 : vector<8x32xf32>
    %cst_26 = arith.constant 1.000000e+00 : f32
    %80 = vector.broadcast %cst_26 : f32 to vector<8x32xf32>
    %81 = arith.addf %80, %79 : vector<8x32xf32>
    %82 = arith.divf %80, %81 : vector<8x32xf32>
    %83 = arith.mulf %82, %59 : vector<8x32xf32>
    %84 = arith.negf %76 : vector<8x32xf32>
    %85 = math.exp %84 : vector<8x32xf32>
    %cst_27 = arith.constant 1.000000e+00 : f32
    %86 = vector.broadcast %cst_27 : f32 to vector<8x32xf32>
    %87 = arith.addf %86, %85 : vector<8x32xf32>
    %88 = arith.divf %86, %87 : vector<8x32xf32>
    %89 = math.tanh %74 : vector<8x32xf32>
    %90 = arith.mulf %88, %89 : vector<8x32xf32>
    %91 = arith.addf %83, %90 : vector<8x32xf32>
    %92 = arith.negf %77 : vector<8x32xf32>
    %93 = math.exp %92 : vector<8x32xf32>
    %cst_28 = arith.constant 1.000000e+00 : f32
    %94 = vector.broadcast %cst_28 : f32 to vector<8x32xf32>
    %95 = arith.addf %94, %93 : vector<8x32xf32>
    %96 = arith.divf %94, %95 : vector<8x32xf32>
    %97 = math.tanh %91 : vector<8x32xf32>
    %98 = arith.mulf %96, %97 : vector<8x32xf32>
    %c0_29 = arith.constant 0 : index
    %c0_30 = arith.constant 0 : index
    %c64 = arith.constant 64 : index
    %99 = vector.load %arg6[%c0_29, %c0_30, %c64] : memref<1x8x256xf32, #tpu.memory_space<vmem>>, vector<1x8x32xf32>
    %100 = vector.shape_cast %99 : vector<1x8x32xf32> to vector<8x32xf32>
    %101 = vector.shape_cast %98 : vector<8x32xf32> to vector<1x8x32xf32>
    tpu.vector_store %arg6[%c0_29, %c0_30, %c64], %101 {strides = array<i32>} : memref<1x8x256xf32, #tpu.memory_space<vmem>>, vector<1x8x32xf32>,
    %c3 = arith.constant 3 : index
    %c0_31 = arith.constant 0 : index
    %c0_32 = arith.constant 0 : index
    %102 = vector.load %arg2[%c3, %c0_31, %c0_32] : memref<8x8x128xf32, #tpu.memory_space<vmem>>, vector<1x8x128xf32>
    %103 = vector.shape_cast %102 : vector<1x8x128xf32> to vector<8x128xf32>
    %cst_33 = arith.constant dense<0.000000e+00> : vector<8x128xf32>
    %104 = tpu.matmul %98, %5, %cst_33 {dimension_numbers = #tpu.dot_dimension_numbers<[1], [0], [0], [1], [0, 0, 1, 1], [], []>} : vector<8x32xf32>, vector<32x128xf32>, vector<8x128xf32> -> vector<8x128xf32>
    %105 = arith.addf %103, %104 : vector<8x128xf32>
    %106 = vector.extract_strided_slice %105 {offsets = [0, 0], sizes = [8, 32], strides = [1, 1]} : vector<8x128xf32> to vector<8x32xf32>
    %107 = vector.extract_strided_slice %105 {offsets = [0, 32], sizes = [8, 32], strides = [1, 1]} : vector<8x128xf32> to vector<8x32xf32>
    %108 = vector.extract_strided_slice %105 {offsets = [0, 64], sizes = [8, 32], strides = [1, 1]} : vector<8x128xf32> to vector<8x32xf32>
    %109 = vector.extract_strided_slice %105 {offsets = [0, 96], sizes = [8, 32], strides = [1, 1]} : vector<8x128xf32> to vector<8x32xf32>
    %110 = arith.negf %107 : vector<8x32xf32>
    %111 = math.exp %110 : vector<8x32xf32>
    %cst_34 = arith.constant 1.000000e+00 : f32
    %112 = vector.broadcast %cst_34 : f32 to vector<8x32xf32>
    %113 = arith.addf %112, %111 : vector<8x32xf32>
    %114 = arith.divf %112, %113 : vector<8x32xf32>
    %115 = arith.mulf %114, %91 : vector<8x32xf32>
    %116 = arith.negf %108 : vector<8x32xf32>
    %117 = math.exp %116 : vector<8x32xf32>
    %cst_35 = arith.constant 1.000000e+00 : f32
    %118 = vector.broadcast %cst_35 : f32 to vector<8x32xf32>
    %119 = arith.addf %118, %117 : vector<8x32xf32>
    %120 = arith.divf %118, %119 : vector<8x32xf32>
    %121 = math.tanh %106 : vector<8x32xf32>
    %122 = arith.mulf %120, %121 : vector<8x32xf32>
    %123 = arith.addf %115, %122 : vector<8x32xf32>
    %124 = arith.negf %109 : vector<8x32xf32>
    %125 = math.exp %124 : vector<8x32xf32>
    %cst_36 = arith.constant 1.000000e+00 : f32
    %126 = vector.broadcast %cst_36 : f32 to vector<8x32xf32>
    %127 = arith.addf %126, %125 : vector<8x32xf32>
    %128 = arith.divf %126, %127 : vector<8x32xf32>
    %129 = math.tanh %123 : vector<8x32xf32>
    %130 = arith.mulf %128, %129 : vector<8x32xf32>
    %c0_37 = arith.constant 0 : index
    %c0_38 = arith.constant 0 : index
    %c96 = arith.constant 96 : index
    %131 = vector.load %arg6[%c0_37, %c0_38, %c96] : memref<1x8x256xf32, #tpu.memory_space<vmem>>, vector<1x8x32xf32>
    %132 = vector.shape_cast %131 : vector<1x8x32xf32> to vector<8x32xf32>
    %133 = vector.shape_cast %130 : vector<8x32xf32> to vector<1x8x32xf32>
    tpu.vector_store %arg6[%c0_37, %c0_38, %c96], %133 {strides = array<i32>} : memref<1x8x256xf32, #tpu.memory_space<vmem>>, vector<1x8x32xf32>,
    %c4 = arith.constant 4 : index
    %c0_39 = arith.constant 0 : index
    %c0_40 = arith.constant 0 : index
    %134 = vector.load %arg2[%c4, %c0_39, %c0_40] : memref<8x8x128xf32, #tpu.memory_space<vmem>>, vector<1x8x128xf32>
    %135 = vector.shape_cast %134 : vector<1x8x128xf32> to vector<8x128xf32>
    %cst_41 = arith.constant dense<0.000000e+00> : vector<8x128xf32>
    %136 = tpu.matmul %130, %5, %cst_41 {dimension_numbers = #tpu.dot_dimension_numbers<[1], [0], [0], [1], [0, 0, 1, 1], [], []>} : vector<8x32xf32>, vector<32x128xf32>, vector<8x128xf32> -> vector<8x128xf32>
    %137 = arith.addf %135, %136 : vector<8x128xf32>
    %138 = vector.extract_strided_slice %137 {offsets = [0, 0], sizes = [8, 32], strides = [1, 1]} : vector<8x128xf32> to vector<8x32xf32>
    %139 = vector.extract_strided_slice %137 {offsets = [0, 32], sizes = [8, 32], strides = [1, 1]} : vector<8x128xf32> to vector<8x32xf32>
    %140 = vector.extract_strided_slice %137 {offsets = [0, 64], sizes = [8, 32], strides = [1, 1]} : vector<8x128xf32> to vector<8x32xf32>
    %141 = vector.extract_strided_slice %137 {offsets = [0, 96], sizes = [8, 32], strides = [1, 1]} : vector<8x128xf32> to vector<8x32xf32>
    %142 = arith.negf %139 : vector<8x32xf32>
    %143 = math.exp %142 : vector<8x32xf32>
    %cst_42 = arith.constant 1.000000e+00 : f32
    %144 = vector.broadcast %cst_42 : f32 to vector<8x32xf32>
    %145 = arith.addf %144, %143 : vector<8x32xf32>
    %146 = arith.divf %144, %145 : vector<8x32xf32>
    %147 = arith.mulf %146, %123 : vector<8x32xf32>
    %148 = arith.negf %140 : vector<8x32xf32>
    %149 = math.exp %148 : vector<8x32xf32>
    %cst_43 = arith.constant 1.000000e+00 : f32
    %150 = vector.broadcast %cst_43 : f32 to vector<8x32xf32>
    %151 = arith.addf %150, %149 : vector<8x32xf32>
    %152 = arith.divf %150, %151 : vector<8x32xf32>
    %153 = math.tanh %138 : vector<8x32xf32>
    %154 = arith.mulf %152, %153 : vector<8x32xf32>
    %155 = arith.addf %147, %154 : vector<8x32xf32>
    %156 = arith.negf %141 : vector<8x32xf32>
    %157 = math.exp %156 : vector<8x32xf32>
    %cst_44 = arith.constant 1.000000e+00 : f32
    %158 = vector.broadcast %cst_44 : f32 to vector<8x32xf32>
    %159 = arith.addf %158, %157 : vector<8x32xf32>
    %160 = arith.divf %158, %159 : vector<8x32xf32>
    %161 = math.tanh %155 : vector<8x32xf32>
    %162 = arith.mulf %160, %161 : vector<8x32xf32>
    %c0_45 = arith.constant 0 : index
    %c0_46 = arith.constant 0 : index
    %c128 = arith.constant 128 : index
    %163 = vector.load %arg6[%c0_45, %c0_46, %c128] : memref<1x8x256xf32, #tpu.memory_space<vmem>>, vector<1x8x32xf32>
    %164 = vector.shape_cast %163 : vector<1x8x32xf32> to vector<8x32xf32>
    %165 = vector.shape_cast %162 : vector<8x32xf32> to vector<1x8x32xf32>
    tpu.vector_store %arg6[%c0_45, %c0_46, %c128], %165 {strides = array<i32>} : memref<1x8x256xf32, #tpu.memory_space<vmem>>, vector<1x8x32xf32>,
    %c5 = arith.constant 5 : index
    %c0_47 = arith.constant 0 : index
    %c0_48 = arith.constant 0 : index
    %166 = vector.load %arg2[%c5, %c0_47, %c0_48] : memref<8x8x128xf32, #tpu.memory_space<vmem>>, vector<1x8x128xf32>
    %167 = vector.shape_cast %166 : vector<1x8x128xf32> to vector<8x128xf32>
    %cst_49 = arith.constant dense<0.000000e+00> : vector<8x128xf32>
    %168 = tpu.matmul %162, %5, %cst_49 {dimension_numbers = #tpu.dot_dimension_numbers<[1], [0], [0], [1], [0, 0, 1, 1], [], []>} : vector<8x32xf32>, vector<32x128xf32>, vector<8x128xf32> -> vector<8x128xf32>
    %169 = arith.addf %167, %168 : vector<8x128xf32>
    %170 = vector.extract_strided_slice %169 {offsets = [0, 0], sizes = [8, 32], strides = [1, 1]} : vector<8x128xf32> to vector<8x32xf32>
    %171 = vector.extract_strided_slice %169 {offsets = [0, 32], sizes = [8, 32], strides = [1, 1]} : vector<8x128xf32> to vector<8x32xf32>
    %172 = vector.extract_strided_slice %169 {offsets = [0, 64], sizes = [8, 32], strides = [1, 1]} : vector<8x128xf32> to vector<8x32xf32>
    %173 = vector.extract_strided_slice %169 {offsets = [0, 96], sizes = [8, 32], strides = [1, 1]} : vector<8x128xf32> to vector<8x32xf32>
    %174 = arith.negf %171 : vector<8x32xf32>
    %175 = math.exp %174 : vector<8x32xf32>
    %cst_50 = arith.constant 1.000000e+00 : f32
    %176 = vector.broadcast %cst_50 : f32 to vector<8x32xf32>
    %177 = arith.addf %176, %175 : vector<8x32xf32>
    %178 = arith.divf %176, %177 : vector<8x32xf32>
    %179 = arith.mulf %178, %155 : vector<8x32xf32>
    %180 = arith.negf %172 : vector<8x32xf32>
    %181 = math.exp %180 : vector<8x32xf32>
    %cst_51 = arith.constant 1.000000e+00 : f32
    %182 = vector.broadcast %cst_51 : f32 to vector<8x32xf32>
    %183 = arith.addf %182, %181 : vector<8x32xf32>
    %184 = arith.divf %182, %183 : vector<8x32xf32>
    %185 = math.tanh %170 : vector<8x32xf32>
    %186 = arith.mulf %184, %185 : vector<8x32xf32>
    %187 = arith.addf %179, %186 : vector<8x32xf32>
    %188 = arith.negf %173 : vector<8x32xf32>
    %189 = math.exp %188 : vector<8x32xf32>
    %cst_52 = arith.constant 1.000000e+00 : f32
    %190 = vector.broadcast %cst_52 : f32 to vector<8x32xf32>
    %191 = arith.addf %190, %189 : vector<8x32xf32>
    %192 = arith.divf %190, %191 : vector<8x32xf32>
    %193 = math.tanh %187 : vector<8x32xf32>
    %194 = arith.mulf %192, %193 : vector<8x32xf32>
    %c0_53 = arith.constant 0 : index
    %c0_54 = arith.constant 0 : index
    %c160 = arith.constant 160 : index
    %195 = vector.load %arg6[%c0_53, %c0_54, %c160] : memref<1x8x256xf32, #tpu.memory_space<vmem>>, vector<1x8x32xf32>
    %196 = vector.shape_cast %195 : vector<1x8x32xf32> to vector<8x32xf32>
    %197 = vector.shape_cast %194 : vector<8x32xf32> to vector<1x8x32xf32>
    tpu.vector_store %arg6[%c0_53, %c0_54, %c160], %197 {strides = array<i32>} : memref<1x8x256xf32, #tpu.memory_space<vmem>>, vector<1x8x32xf32>,
    %c6 = arith.constant 6 : index
    %c0_55 = arith.constant 0 : index
    %c0_56 = arith.constant 0 : index
    %198 = vector.load %arg2[%c6, %c0_55, %c0_56] : memref<8x8x128xf32, #tpu.memory_space<vmem>>, vector<1x8x128xf32>
    %199 = vector.shape_cast %198 : vector<1x8x128xf32> to vector<8x128xf32>
    %cst_57 = arith.constant dense<0.000000e+00> : vector<8x128xf32>
    %200 = tpu.matmul %194, %5, %cst_57 {dimension_numbers = #tpu.dot_dimension_numbers<[1], [0], [0], [1], [0, 0, 1, 1], [], []>} : vector<8x32xf32>, vector<32x128xf32>, vector<8x128xf32> -> vector<8x128xf32>
    %201 = arith.addf %199, %200 : vector<8x128xf32>
    %202 = vector.extract_strided_slice %201 {offsets = [0, 0], sizes = [8, 32], strides = [1, 1]} : vector<8x128xf32> to vector<8x32xf32>
    %203 = vector.extract_strided_slice %201 {offsets = [0, 32], sizes = [8, 32], strides = [1, 1]} : vector<8x128xf32> to vector<8x32xf32>
    %204 = vector.extract_strided_slice %201 {offsets = [0, 64], sizes = [8, 32], strides = [1, 1]} : vector<8x128xf32> to vector<8x32xf32>
    %205 = vector.extract_strided_slice %201 {offsets = [0, 96], sizes = [8, 32], strides = [1, 1]} : vector<8x128xf32> to vector<8x32xf32>
    %206 = arith.negf %203 : vector<8x32xf32>
    %207 = math.exp %206 : vector<8x32xf32>
    %cst_58 = arith.constant 1.000000e+00 : f32
    %208 = vector.broadcast %cst_58 : f32 to vector<8x32xf32>
    %209 = arith.addf %208, %207 : vector<8x32xf32>
    %210 = arith.divf %208, %209 : vector<8x32xf32>
    %211 = arith.mulf %210, %187 : vector<8x32xf32>
    %212 = arith.negf %204 : vector<8x32xf32>
    %213 = math.exp %212 : vector<8x32xf32>
    %cst_59 = arith.constant 1.000000e+00 : f32
    %214 = vector.broadcast %cst_59 : f32 to vector<8x32xf32>
    %215 = arith.addf %214, %213 : vector<8x32xf32>
    %216 = arith.divf %214, %215 : vector<8x32xf32>
    %217 = math.tanh %202 : vector<8x32xf32>
    %218 = arith.mulf %216, %217 : vector<8x32xf32>
    %219 = arith.addf %211, %218 : vector<8x32xf32>
    %220 = arith.negf %205 : vector<8x32xf32>
    %221 = math.exp %220 : vector<8x32xf32>
    %cst_60 = arith.constant 1.000000e+00 : f32
    %222 = vector.broadcast %cst_60 : f32 to vector<8x32xf32>
    %223 = arith.addf %222, %221 : vector<8x32xf32>
    %224 = arith.divf %222, %223 : vector<8x32xf32>
    %225 = math.tanh %219 : vector<8x32xf32>
    %226 = arith.mulf %224, %225 : vector<8x32xf32>
    %c0_61 = arith.constant 0 : index
    %c0_62 = arith.constant 0 : index
    %c192 = arith.constant 192 : index
    %227 = vector.load %arg6[%c0_61, %c0_62, %c192] : memref<1x8x256xf32, #tpu.memory_space<vmem>>, vector<1x8x32xf32>
    %228 = vector.shape_cast %227 : vector<1x8x32xf32> to vector<8x32xf32>
    %229 = vector.shape_cast %226 : vector<8x32xf32> to vector<1x8x32xf32>
    tpu.vector_store %arg6[%c0_61, %c0_62, %c192], %229 {strides = array<i32>} : memref<1x8x256xf32, #tpu.memory_space<vmem>>, vector<1x8x32xf32>,
    %c7 = arith.constant 7 : index
    %c0_63 = arith.constant 0 : index
    %c0_64 = arith.constant 0 : index
    %230 = vector.load %arg2[%c7, %c0_63, %c0_64] : memref<8x8x128xf32, #tpu.memory_space<vmem>>, vector<1x8x128xf32>
    %231 = vector.shape_cast %230 : vector<1x8x128xf32> to vector<8x128xf32>
    %cst_65 = arith.constant dense<0.000000e+00> : vector<8x128xf32>
    %232 = tpu.matmul %226, %5, %cst_65 {dimension_numbers = #tpu.dot_dimension_numbers<[1], [0], [0], [1], [0, 0, 1, 1], [], []>} : vector<8x32xf32>, vector<32x128xf32>, vector<8x128xf32> -> vector<8x128xf32>
    %233 = arith.addf %231, %232 : vector<8x128xf32>
    %234 = vector.extract_strided_slice %233 {offsets = [0, 0], sizes = [8, 32], strides = [1, 1]} : vector<8x128xf32> to vector<8x32xf32>
    %235 = vector.extract_strided_slice %233 {offsets = [0, 32], sizes = [8, 32], strides = [1, 1]} : vector<8x128xf32> to vector<8x32xf32>
    %236 = vector.extract_strided_slice %233 {offsets = [0, 64], sizes = [8, 32], strides = [1, 1]} : vector<8x128xf32> to vector<8x32xf32>
    %237 = vector.extract_strided_slice %233 {offsets = [0, 96], sizes = [8, 32], strides = [1, 1]} : vector<8x128xf32> to vector<8x32xf32>
    %238 = arith.negf %235 : vector<8x32xf32>
    %239 = math.exp %238 : vector<8x32xf32>
    %cst_66 = arith.constant 1.000000e+00 : f32
    %240 = vector.broadcast %cst_66 : f32 to vector<8x32xf32>
    %241 = arith.addf %240, %239 : vector<8x32xf32>
    %242 = arith.divf %240, %241 : vector<8x32xf32>
    %243 = arith.mulf %242, %219 : vector<8x32xf32>
    %244 = arith.negf %236 : vector<8x32xf32>
    %245 = math.exp %244 : vector<8x32xf32>
    %cst_67 = arith.constant 1.000000e+00 : f32
    %246 = vector.broadcast %cst_67 : f32 to vector<8x32xf32>
    %247 = arith.addf %246, %245 : vector<8x32xf32>
    %248 = arith.divf %246, %247 : vector<8x32xf32>
    %249 = math.tanh %234 : vector<8x32xf32>
    %250 = arith.mulf %248, %249 : vector<8x32xf32>
    %251 = arith.addf %243, %250 : vector<8x32xf32>
    %252 = arith.negf %237 : vector<8x32xf32>
    %253 = math.exp %252 : vector<8x32xf32>
    %cst_68 = arith.constant 1.000000e+00 : f32
    %254 = vector.broadcast %cst_68 : f32 to vector<8x32xf32>
    %255 = arith.addf %254, %253 : vector<8x32xf32>
    %256 = arith.divf %254, %255 : vector<8x32xf32>
    %257 = math.tanh %251 : vector<8x32xf32>
    %258 = arith.mulf %256, %257 : vector<8x32xf32>
    %c0_69 = arith.constant 0 : index
    %c0_70 = arith.constant 0 : index
    %c224 = arith.constant 224 : index
    %259 = vector.load %arg6[%c0_69, %c0_70, %c224] : memref<1x8x256xf32, #tpu.memory_space<vmem>>, vector<1x8x32xf32>
    %260 = vector.shape_cast %259 : vector<1x8x32xf32> to vector<8x32xf32>
    %261 = vector.shape_cast %258 : vector<8x32xf32> to vector<1x8x32xf32>
    tpu.vector_store %arg6[%c0_69, %c0_70, %c224], %261 {strides = array<i32>} : memref<1x8x256xf32, #tpu.memory_space<vmem>>, vector<1x8x32xf32>,
    %c0_71 = arith.constant 0 : index
    %c0_72 = arith.constant 0 : index
    %262 = vector.load %arg9[%c0_71, %c0_72] : memref<8x32xf32, #tpu.memory_space<vmem>>, vector<8x32xf32>
    tpu.vector_store %arg9[%c0_71, %c0_72], %258 {strides = array<i32>} : memref<8x32xf32, #tpu.memory_space<vmem>>, vector<8x32xf32>,
    %c0_73 = arith.constant 0 : index
    %c0_74 = arith.constant 0 : index
    %263 = vector.load %arg10[%c0_73, %c0_74] : memref<8x32xf32, #tpu.memory_space<vmem>>, vector<8x32xf32>
    tpu.vector_store %arg10[%c0_73, %c0_74], %251 {strides = array<i32>} : memref<8x32xf32, #tpu.memory_space<vmem>>, vector<8x32xf32>,
    %c0_i32_75 = arith.constant 0 : i32
    %264 = arith.cmpi eq, %arg1, %c0_i32_75 : i32
    %265 = arith.extui %264 : i1 to i32
    %c0_i32_76 = arith.constant 0 : i32
    %266 = arith.cmpi ne, %265, %c0_i32_76 : i32
    scf.if %266 {
      %c0_77 = arith.constant 0 : index
      %c0_78 = arith.constant 0 : index
      %267 = vector.load %arg7[%c0_77, %c0_78] : memref<8x32xf32, #tpu.memory_space<vmem>>, vector<8x32xf32>
      tpu.vector_store %arg7[%c0_77, %c0_78], %258 {strides = array<i32>} : memref<8x32xf32, #tpu.memory_space<vmem>>, vector<8x32xf32>,
      %c0_79 = arith.constant 0 : index
      %c0_80 = arith.constant 0 : index
      %268 = vector.load %arg8[%c0_79, %c0_80] : memref<8x32xf32, #tpu.memory_space<vmem>>, vector<8x32xf32>
      tpu.vector_store %arg8[%c0_79, %c0_80], %251 {strides = array<i32>} : memref<8x32xf32, #tpu.memory_space<vmem>>, vector<8x32xf32>,
    } else {
    }
    return
  }
  func.func @transform_0(%arg0: i32, %arg1: i32) -> (i32, i32, i32) {
    %c0_i32 = arith.constant 0 : i32
    %c0_i32_0 = arith.constant 0 : i32
    return %arg1, %arg0, %c0_i32 : i32, i32, i32
  }
  func.func @transform_1(%arg0: i32, %arg1: i32) -> (i32, i32) {
    %c0_i32 = arith.constant 0 : i32
    %c0_i32_0 = arith.constant 0 : i32
    return %arg0, %c0_i32 : i32, i32
  }
  func.func @transform_2(%arg0: i32, %arg1: i32) -> (i32, i32) {
    %c0_i32 = arith.constant 0 : i32
    %c0_i32_0 = arith.constant 0 : i32
    return %arg0, %c0_i32 : i32, i32
  }
  func.func @transform_3(%arg0: i32, %arg1: i32) -> (i32, i32) {
    %c0_i32 = arith.constant 0 : i32
    %c0_i32_0 = arith.constant 0 : i32
    %c0_i32_1 = arith.constant 0 : i32
    return %c0_i32, %c0_i32_0 : i32, i32
  }
  func.func @transform_4(%arg0: i32, %arg1: i32) -> (i32, i32, i32) {
    %c0_i32 = arith.constant 0 : i32
    %c0_i32_0 = arith.constant 0 : i32
    return %arg1, %arg0, %c0_i32 : i32, i32, i32
  }
  func.func @transform_5(%arg0: i32, %arg1: i32) -> (i32, i32) {
    %c0_i32 = arith.constant 0 : i32
    %c0_i32_0 = arith.constant 0 : i32
    return %arg0, %c0_i32 : i32, i32
  }
  func.func @transform_6(%arg0: i32, %arg1: i32) -> (i32, i32) {
    %c0_i32 = arith.constant 0 : i32
    %c0_i32_0 = arith.constant 0 : i32
    return %arg0, %c0_i32 : i32, i32
  }
}

</mosaic_0001>

<llo_original>
// kernel: tpu_custom_call.1
$region0: #{tpu_custom_call.1}
  #allocation0 [shape = 'u32[]', space=smem, size = 0x4, offset = 0x4, fixed_abs, tag = 'smem constant byte address 0x4 - core index']
  #allocation1 [shape = 'u32[144,128]{1,0:T(1,128)}', space=vmem, size = 0x12000, scoped, tag = 'internal scratch']
  #allocation2 [shape = 'f32[8,32]{1,0:T(8,128)}', space=vmem, size = 0x1000, scoped, tag = 'scratch operand']
  #allocation3 [shape = 'f32[8,32]{1,0:T(8,128)}', space=vmem, size = 0x1000, scoped, tag = 'scratch operand']
  %s0 = inlined_call_operand.hbm [shape: f32[8,8,128], index: 0, kind: input, shape index: {}]
  %s1 = inlined_call_operand.hbm [shape: f32[8,32], index: 1, kind: input, shape index: {}]
  %s2 = inlined_call_operand.hbm [shape: f32[8,32], index: 2, kind: input, shape index: {}]
  %s3 = inlined_call_operand.hbm [shape: f32[32,128], index: 3, kind: input, shape index: {}]
  %s4 = inlined_call_operand.hbm [shape: f32[1,8,256], index: 4, kind: output, shape index: {0}]
  %s5 = inlined_call_operand.hbm [shape: f32[8,32], index: 5, kind: output, shape index: {1}]
  %s6 = inlined_call_operand.hbm [shape: f32[8,32], index: 6, kind: output, shape index: {2}]
  %7 = xla_tuple %s4, %s5, %s6
  %s8 = sld [smem:[#allocation0]]
  $region66: #{tpu_custom_call.1} parent=0
    _
  %s10 = ssub.s32 1, %s8
  %s11 = scalar_select 0, %s10, %s8
  $region1: #{tpu_custom_call.1} parent=0
    #allocation4 [shape = 'u8[32768]{0}', space=vmem, size = 0x8000, scoped, tag = 'input window, operand 0, single buffered']
    #allocation5 [shape = 's32[1]{0}', space=sflag, size = 0x4, scoped, tag = 'scoped memory for tpu_custom_call.1']
    #allocation6 [shape = 's32[1]{0}', space=sflag, size = 0x4, scoped, tag = 'scoped memory for tpu_custom_call.1']
    #allocation7 [shape = 'u8[4096]{0}', space=vmem, size = 0x1000, scoped, tag = 'input window, operand 1, single buffered']
    #allocation8 [shape = 's32[1]{0}', space=sflag, size = 0x4, scoped, tag = 'scoped memory for tpu_custom_call.1']
    #allocation9 [shape = 'u8[4096]{0}', space=vmem, size = 0x1000, scoped, tag = 'input window, operand 2, single buffered']
    #allocation10 [shape = 'u8[16384]{0}', space=vmem, size = 0x4000, scoped, tag = 'input window, operand 3, single buffered']
    #allocation11 [shape = 's32[1]{0}', space=sflag, size = 0x4, scoped, tag = 'scoped memory for tpu_custom_call.1']
    #allocation12 [shape = 'u8[8192]{0}', space=vmem, size = 0x2000, scoped, tag = 'output window, operand 0, single buffered']
    #allocation13 [shape = 'u8[4096]{0}', space=vmem, size = 0x1000, scoped, tag = 'output window, operand 1, single buffered']
    #allocation14 [shape = 's32[1]{0}', space=sflag, size = 0x4, scoped, tag = 'scoped memory for tpu_custom_call.1']
    #allocation15 [shape = 'u8[4096]{0}', space=vmem, size = 0x1000, scoped, tag = 'output window, operand 2, single buffered']
    %12 = vsyncpa [#allocation5], 0
    %13 = vsyncpa [#allocation8], 0
    %14 = vsyncpa [#allocation11], 0
    %15 = vsyncpa [#allocation6], 0
    %16 = vsyncpa [#allocation14], 0
    // Predicated region
    $region2: #{tpu_custom_call.1} parent=1 // pred_check
      _
    $region3: #{tpu_custom_call.1} parent=1 // pred_check_branch
      %18 = sbr.rel (0) target = $region5
    $region4: #{tpu_custom_call.1} parent=1 // pred_region
      %s20 = ssub.s32 1024, 1024
      %21 = vsyncadd [#allocation5], %s20
      %s22 = sshll.u32 [#allocation4], 4
      %s23 = int_to_ptr.vmem [resolvable:$true] %s22
      %28 = dma.hbm_to_vmem [thread:$0]  %s0, 1024, %s23, [#allocation5], 128, 128, 8
    $region5: #{tpu_custom_call.1} parent=1 // pred_fallthru
      _
    // Predicated region
    $region6: #{tpu_custom_call.1} parent=1 // pred_check
      _
    $region7: #{tpu_custom_call.1} parent=1 // pred_check_branch
      %30 = sbr.rel (0) target = $region9
    $region8: #{tpu_custom_call.1} parent=1 // pred_region
      %s32 = ssub.s32 128, 128
      %33 = vsyncadd [#allocation8], %s32
      %s35 = sshll.u32 [#allocation7], 4
      %s36 = int_to_ptr.vmem [resolvable:$true] %s35
      %38 = dma.hbm_to_vmem [thread:$0]  %s1, 128, %s36, [#allocation8]
    $region9: #{tpu_custom_call.1} parent=1 // pred_fallthru
      _
    // Predicated region
    $region10: #{tpu_custom_call.1} parent=1 // pred_check
      _
    $region11: #{tpu_custom_call.1} parent=1 // pred_check_branch
      %40 = sbr.rel (0) target = $region13
    $region12: #{tpu_custom_call.1} parent=1 // pred_region
      %s42 = ssub.s32 128, 128
      %43 = vsyncadd [#allocation8], %s42
      %s45 = sshll.u32 [#allocation9], 4
      %s46 = int_to_ptr.vmem [resolvable:$true] %s45
      %48 = dma.hbm_to_vmem [thread:$0]  %s2, 128, %s46, [#allocation8]
    $region13: #{tpu_custom_call.1} parent=1 // pred_fallthru
      _
    // Predicated region
    $region14: #{tpu_custom_call.1} parent=1 // pred_check
      _
    $region15: #{tpu_custom_call.1} parent=1 // pred_check_branch
      %50 = sbr.rel (0) target = $region17
    $region16: #{tpu_custom_call.1} parent=1 // pred_region
      %s52 = ssub.s32 512, 512
      %53 = vsyncadd [#allocation11], %s52
      %s54 = sshll.u32 [#allocation10], 4
      %s55 = int_to_ptr.vmem [resolvable:$true] %s54
      %60 = dma.hbm_to_vmem [thread:$0]  %s3, 512, %s55, [#allocation11], 128, 128, 8
    $region17: #{tpu_custom_call.1} parent=1 // pred_fallthru
      _
    // Predicated region
    $region18: #{tpu_custom_call.1} parent=1 // pred_check
      _
    $region19: #{tpu_custom_call.1} parent=1 // pred_check_branch
      %62 = sbr.rel (0) target = $region21
    $region20: #{tpu_custom_call.1} parent=1 // pred_region
      %63 = dma.done [#allocation5], 1024
    $region21: #{tpu_custom_call.1} parent=1 // pred_fallthru
      _
    // Predicated region
    $region22: #{tpu_custom_call.1} parent=1 // pred_check
      _
    $region23: #{tpu_custom_call.1} parent=1 // pred_check_branch
      %65 = sbr.rel (0) target = $region25
    $region24: #{tpu_custom_call.1} parent=1 // pred_region
      %66 = dma.done [#allocation8], 128
    $region25: #{tpu_custom_call.1} parent=1 // pred_fallthru
      _
    // Predicated region
    $region26: #{tpu_custom_call.1} parent=1 // pred_check
      _
    $region27: #{tpu_custom_call.1} parent=1 // pred_check_branch
      %68 = sbr.rel (0) target = $region29
    $region28: #{tpu_custom_call.1} parent=1 // pred_region
      %69 = dma.done [#allocation8], 128
    $region29: #{tpu_custom_call.1} parent=1 // pred_fallthru
      _
    // Predicated region
    $region30: #{tpu_custom_call.1} parent=1 // pred_check
      _
    $region31: #{tpu_custom_call.1} parent=1 // pred_check_branch
      %71 = sbr.rel (0) target = $region33
    $region32: #{tpu_custom_call.1} parent=1 // pred_region
      %72 = dma.done [#allocation11], 512
    $region33: #{tpu_custom_call.1} parent=1 // pred_fallthru
      _
    %p73 = scmp.eq.s32.totalorder 0, 0
    // Predicated region
    $region34: #{tpu_custom_call.1} parent=1 // pred_check
      %p74 = pneg %p73
    $region35: #{tpu_custom_call.1} parent=1 // pred_check_branch
      %76 = sbr.rel (%p74) target = $region37
    $region36: #{tpu_custom_call.1} parent=1 // pred_region
      %v77 = vld [vmem:[#allocation7] sm:$0xff]
      %vm78 = vcmask 261120
      %79 = vst.msk [vmem:[#allocation2] sm:$0xff] %vm78, %v77
      %v80 = vld [vmem:[#allocation9] sm:$0xff]
      %81 = vst.msk [vmem:[#allocation3] sm:$0xff] %vm78, %v80
    $region37: #{tpu_custom_call.1} parent=1 // pred_fallthru
      _
    %v82 = vld [vmem:[#allocation2] sm:$0xff]
    %v83 = vld [vmem:[#allocation3] sm:$0xff]
    %v84 = vld [vmem:[#allocation10] sm:$0xff]
    %v85 = vld [vmem:[#allocation10 + $0x8] sm:$0xff]
    %v86 = vld [vmem:[#allocation10 + $0x10] sm:$0xff]
    %v87 = vld [vmem:[#allocation10 + $0x18] sm:$0xff]
    %v88 = vld [vmem:[#allocation4] sm:$0xff]
    %vm89 = vcmask 261120
    %v91 = vsel %vm89, %v82, 0
    %93 = vmatprep.subr.mxu0 0.0
    %94 = vmatpush1.msra.mxu0 %v84
    %95 = vmatprep.subr.mxu0 0.0
    %96 = vmatpush1.msra.mxu0 %v85
    %97 = vmatprep.subr.mxu0 0.0
    %98 = vmatpush1.msra.mxu0 %v86
    %99 = vmatprep.subr.mxu0 0.0
    %100 = vmatpush1.msra.mxu0 %v87
    %101 = vmatprep.subr.mxu0 0.0
    %102 = vmatpush1.msra.mxu0 0.0
    %103 = vmatprep.subr.mxu0 0.0
    %104 = vmatpush1.msra.mxu0 0.0
    %105 = vmatprep.subr.mxu0 0.0
    %106 = vmatpush1.msra.mxu0 0.0
    %107 = vmatprep.subr.mxu0 0.0
    %108 = vmatpush1.msra.mxu0 0.0
    %109 = vmatprep.subr.mxu0 0.0
    %110 = vmatpush1.msra.mxu0 0.0
    %111 = vmatprep.subr.mxu0 0.0
    %112 = vmatpush1.msra.mxu0 0.0
    %113 = vmatprep.subr.mxu0 0.0
    %114 = vmatpush1.msra.mxu0 0.0
    %115 = vmatprep.subr.mxu0 0.0
    %116 = vmatpush1.msra.mxu0 0.0
    %117 = vmatprep.subr.mxu0 0.0
    %118 = vmatpush1.msra.mxu0 0.0
    %119 = vmatprep.subr.mxu0 0.0
    %120 = vmatpush1.msra.mxu0 0.0
    %121 = vmatprep.subr.mxu0 0.0
    %122 = vmatpush1.msra.mxu0 0.0
    %123 = vmatprep.subr.mxu0 0.0
    %124 = vmatpush1.msra.mxu0 0.0
    %125 = vmatprep.subr.mxu0 0.0
    %126 = vmatpush1.msra.mxu0 0.0
    %127 = vmatprep.subr.mxu0 0.0
    %128 = vmatpush1.msra.mxu0 0.0
    %129 = vmatprep.subr.mxu0 0.0
    %130 = vmatpush1.msra.mxu0 0.0
    %131 = vmatprep.subr.mxu0 0.0
    %132 = vmatpush1.msra.mxu0 0.0
    %133 = vmatprep.subr.mxu0 0.0
    %134 = vmatpush1.msra.mxu0 0.0
    %135 = vmatprep.subr.mxu0 0.0
    %136 = vmatpush1.msra.mxu0 0.0
    %137 = vmatprep.subr.mxu0 0.0
    %138 = vmatpush1.msra.mxu0 0.0
    %139 = vmatprep.subr.mxu0 0.0
    %140 = vmatpush1.msra.mxu0 0.0
    %141 = vmatprep.subr.mxu0 0.0
    %142 = vmatpush1.msra.mxu0 0.0
    %143 = vmatprep.subr.mxu0 0.0
    %144 = vmatpush1.msra.mxu0 0.0
    %145 = vmatprep.subr.mxu0 0.0
    %146 = vmatpush1.msra.mxu0 0.0
    %147 = vmatprep.subr.mxu0 0.0
    %148 = vmatpush1.msra.mxu0 0.0
    %149 = vmatprep.subr.mxu0 0.0
    %150 = vmatpush1.msra.mxu0 0.0
    %151 = vmatprep.subr.mxu0 0.0
    %152 = vmatpush1.msra.mxu0 0.0
    %153 = vmatprep.subr.mxu0 0.0
    %154 = vmatpush1.msra.mxu0 0.0
    %155 = vmatprep.subr.mxu0 0.0
    %156 = vmatpush1.msra.mxu0 0.0
    %157 = vmatprep.mubr.f32.mxu0 0.0
    %158 = vmatmul.mubr.f32.gmra.mrb[0].mxu0 %v91
    %v159 = vpop.f32.mrb[0].mxu0
    %v160 = vadd.f32 0.0, %v159
    %v161 = vpop.f32.mrb[0].mxu0
    %162 = vdwg.mxu0
    %v163 = vadd.f32 %v88, %v160
    %v164 = vxor.u32 %v163, 2147483648
    %v165 = vmul.f32 %v164, 1.442695
    %v166 = vpow.pop %v165
    %v167 = vadd.f32 %v166, 1.0
    %v168 = vrcp.pop %v167
    %v169 = vmul.f32 1.0, %v168
    %171 = vrot.lane.b32.xlu0 %v83, 32
    %v172 = vpop.permute.xlu0 %171
    %v174 = vmul.f32 %v169, %v172
    %v175 = vtanh.pop %v163
    %177 = vrot.lane.b32.xlu0 %v175, 64
    %v178 = vpop.permute.xlu0 %177
    %v180 = vmul.f32 %v169, %v178
    %182 = vrot.lane.b32.xlu0 %v180, 96
    %v183 = vpop.permute.xlu0 %182
    %v185 = vadd.f32 %v174, %v183
    %v186 = vtanh.pop %v185
    %188 = vrot.lane.b32.xlu0 %v186, 64
    %v189 = vpop.permute.xlu0 %188
    %v191 = vmul.f32 %v169, %v189
    %193 = vrot.lane.b32.xlu0 %v191, 32
    %v194 = vpop.permute.xlu0 %193
    %196 = vst.msk [vmem:[#allocation12] sm:$0xff] %vm89, %v194
    %s197 = scalar_lea.vmem [#allocation4], 8
    %v198 = vld [vmem:[%s197] sm:$0xff]
    %v199 = vsel %vm89, %v194, 0
    %201 = vmatprep.subr.mxu0 0.0
    %202 = vmatpush1.msra.mxu0 %v84
    %203 = vmatprep.subr.mxu0 0.0
    %204 = vmatpush1.msra.mxu0 %v85
    %205 = vmatprep.subr.mxu0 0.0
    %206 = vmatpush1.msra.mxu0 %v86
    %207 = vmatprep.subr.mxu0 0.0
    %208 = vmatpush1.msra.mxu0 %v87
    %209 = vmatprep.subr.mxu0 0.0
    %210 = vmatpush1.msra.mxu0 0.0
    %211 = vmatprep.subr.mxu0 0.0
    %212 = vmatpush1.msra.mxu0 0.0
    %213 = vmatprep.subr.mxu0 0.0
    %214 = vmatpush1.msra.mxu0 0.0
    %215 = vmatprep.subr.mxu0 0.0
    %216 = vmatpush1.msra.mxu0 0.0
    %217 = vmatprep.subr.mxu0 0.0
    %218 = vmatpush1.msra.mxu0 0.0
    %219 = vmatprep.subr.mxu0 0.0
    %220 = vmatpush1.msra.mxu0 0.0
    %221 = vmatprep.subr.mxu0 0.0
    %222 = vmatpush1.msra.mxu0 0.0
    %223 = vmatprep.subr.mxu0 0.0
    %224 = vmatpush1.msra.mxu0 0.0
    %225 = vmatprep.subr.mxu0 0.0
    %226 = vmatpush1.msra.mxu0 0.0
    %227 = vmatprep.subr.mxu0 0.0
    %228 = vmatpush1.msra.mxu0 0.0
    %229 = vmatprep.subr.mxu0 0.0
    %230 = vmatpush1.msra.mxu0 0.0
    %231 = vmatprep.subr.mxu0 0.0
    %232 = vmatpush1.msra.mxu0 0.0
    %233 = vmatprep.subr.mxu0 0.0
    %234 = vmatpush1.msra.mxu0 0.0
    %235 = vmatprep.subr.mxu0 0.0
    %236 = vmatpush1.msra.mxu0 0.0
    %237 = vmatprep.subr.mxu0 0.0
    %238 = vmatpush1.msra.mxu0 0.0
    %239 = vmatprep.subr.mxu0 0.0
    %240 = vmatpush1.msra.mxu0 0.0
    %241 = vmatprep.subr.mxu0 0.0
    %242 = vmatpush1.msra.mxu0 0.0
    %243 = vmatprep.subr.mxu0 0.0
    %244 = vmatpush1.msra.mxu0 0.0
    %245 = vmatprep.subr.mxu0 0.0
    %246 = vmatpush1.msra.mxu0 0.0
    %247 = vmatprep.subr.mxu0 0.0
    %248 = vmatpush1.msra.mxu0 0.0
    %249 = vmatprep.subr.mxu0 0.0
    %250 = vmatpush1.msra.mxu0 0.0
    %251 = vmatprep.subr.mxu0 0.0
    %252 = vmatpush1.msra.mxu0 0.0
    %253 = vmatprep.subr.mxu0 0.0
    %254 = vmatpush1.msra.mxu0 0.0
    %255 = vmatprep.subr.mxu0 0.0
    %256 = vmatpush1.msra.mxu0 0.0
    %257 = vmatprep.subr.mxu0 0.0
    %258 = vmatpush1.msra.mxu0 0.0
    %259 = vmatprep.subr.mxu0 0.0
    %260 = vmatpush1.msra.mxu0 0.0
    %261 = vmatprep.subr.mxu0 0.0
    %262 = vmatpush1.msra.mxu0 0.0
    %263 = vmatprep.subr.mxu0 0.0
    %264 = vmatpush1.msra.mxu0 0.0
    %265 = vmatprep.mubr.f32.mxu0 0.0
    %266 = vmatmul.mubr.f32.gmra.mrb[0].mxu0 %v199
    %v267 = vpop.f32.mrb[0].mxu0
    %v268 = vadd.f32 0.0, %v267
    %v269 = vpop.f32.mrb[0].mxu0
    %270 = vdwg.mxu0
    %v271 = vadd.f32 %v198, %v268
    %v272 = vxor.u32 %v271, 2147483648
    %v273 = vmul.f32 %v272, 1.442695
    %v274 = vpow.pop %v273
    %v275 = vadd.f32 %v274, 1.0
    %v276 = vrcp.pop %v275
    %v277 = vmul.f32 1.0, %v276
    %v278 = vmul.f32 %v277, %v185
    %v279 = vtanh.pop %v271
    %281 = vrot.lane.b32.xlu0 %v279, 64
    %v282 = vpop.permute.xlu0 %281
    %v284 = vmul.f32 %v277, %v282
    %286 = vrot.lane.b32.xlu0 %v284, 96
    %v287 = vpop.permute.xlu0 %286
    %v289 = vadd.f32 %v278, %v287
    %v290 = vtanh.pop %v289
    %292 = vrot.lane.b32.xlu0 %v290, 64
    %v293 = vpop.permute.xlu0 %292
    %v295 = vmul.f32 %v277, %v293
    %297 = vrot.lane.b32.xlu0 %v295, 64
    %v298 = vpop.permute.xlu0 %297
    %vm300 = vcmask 523520
    %301 = vst.msk [vmem:[#allocation12] sm:$0xff] %vm300, %v298
    %s302 = scalar_lea.vmem [#allocation4], 16
    %v303 = vld [vmem:[%s302] sm:$0xff]
    %304 = vrot.lane.b32.xlu0 %v295, 32
    %v305 = vpop.permute.xlu0 %304
    %v306 = vsel %vm89, %v305, 0
    %308 = vmatprep.subr.mxu0 0.0
    %309 = vmatpush1.msra.mxu0 %v84
    %310 = vmatprep.subr.mxu0 0.0
    %311 = vmatpush1.msra.mxu0 %v85
    %312 = vmatprep.subr.mxu0 0.0
    %313 = vmatpush1.msra.mxu0 %v86
    %314 = vmatprep.subr.mxu0 0.0
    %315 = vmatpush1.msra.mxu0 %v87
    %316 = vmatprep.subr.mxu0 0.0
    %317 = vmatpush1.msra.mxu0 0.0
    %318 = vmatprep.subr.mxu0 0.0
    %319 = vmatpush1.msra.mxu0 0.0
    %320 = vmatprep.subr.mxu0 0.0
    %321 = vmatpush1.msra.mxu0 0.0
    %322 = vmatprep.subr.mxu0 0.0
    %323 = vmatpush1.msra.mxu0 0.0
    %324 = vmatprep.subr.mxu0 0.0
    %325 = vmatpush1.msra.mxu0 0.0
    %326 = vmatprep.subr.mxu0 0.0
    %327 = vmatpush1.msra.mxu0 0.0
    %328 = vmatprep.subr.mxu0 0.0
    %329 = vmatpush1.msra.mxu0 0.0
    %330 = vmatprep.subr.mxu0 0.0
    %331 = vmatpush1.msra.mxu0 0.0
    %332 = vmatprep.subr.mxu0 0.0
    %333 = vmatpush1.msra.mxu0 0.0
    %334 = vmatprep.subr.mxu0 0.0
    %335 = vmatpush1.msra.mxu0 0.0
    %336 = vmatprep.subr.mxu0 0.0
    %337 = vmatpush1.msra.mxu0 0.0
    %338 = vmatprep.subr.mxu0 0.0
    %339 = vmatpush1.msra.mxu0 0.0
    %340 = vmatprep.subr.mxu0 0.0
    %341 = vmatpush1.msra.mxu0 0.0
    %342 = vmatprep.subr.mxu0 0.0
    %343 = vmatpush1.msra.mxu0 0.0
    %344 = vmatprep.subr.mxu0 0.0
    %345 = vmatpush1.msra.mxu0 0.0
    %346 = vmatprep.subr.mxu0 0.0
    %347 = vmatpush1.msra.mxu0 0.0
    %348 = vmatprep.subr.mxu0 0.0
    %349 = vmatpush1.msra.mxu0 0.0
    %350 = vmatprep.subr.mxu0 0.0
    %351 = vmatpush1.msra.mxu0 0.0
    %352 = vmatprep.subr.mxu0 0.0
    %353 = vmatpush1.msra.mxu0 0.0
    %354 = vmatprep.subr.mxu0 0.0
    %355 = vmatpush1.msra.mxu0 0.0
    %356 = vmatprep.subr.mxu0 0.0
    %357 = vmatpush1.msra.mxu0 0.0
    %358 = vmatprep.subr.mxu0 0.0
    %359 = vmatpush1.msra.mxu0 0.0
    %360 = vmatprep.subr.mxu0 0.0
    %361 = vmatpush1.msra.mxu0 0.0
    %362 = vmatprep.subr.mxu0 0.0
    %363 = vmatpush1.msra.mxu0 0.0
    %364 = vmatprep.subr.mxu0 0.0
    %365 = vmatpush1.msra.mxu0 0.0
    %366 = vmatprep.subr.mxu0 0.0
    %367 = vmatpush1.msra.mxu0 0.0
    %368 = vmatprep.subr.mxu0 0.0
    %369 = vmatpush1.msra.mxu0 0.0
    %370 = vmatprep.subr.mxu0 0.0
    %371 = vmatpush1.msra.mxu0 0.0
    %372 = vmatprep.mubr.f32.mxu0 0.0
    %373 = vmatmul.mubr.f32.gmra.mrb[0].mxu0 %v306
    %v374 = vpop.f32.mrb[0].mxu0
    %v375 = vadd.f32 0.0, %v374
    %v376 = vpop.f32.mrb[0].mxu0
    %377 = vdwg.mxu0
    %v378 = vadd.f32 %v303, %v375
    %v379 = vxor.u32 %v378, 2147483648
    %v380 = vmul.f32 %v379, 1.442695
    %v381 = vpow.pop %v380
    %v382 = vadd.f32 %v381, 1.0
    %v383 = vrcp.pop %v382
    %v384 = vmul.f32 1.0, %v383
    %v385 = vmul.f32 %v384, %v289
    %v386 = vtanh.pop %v378
    %388 = vrot.lane.b32.xlu0 %v386, 64
    %v389 = vpop.permute.xlu0 %388
    %v391 = vmul.f32 %v384, %v389
    %393 = vrot.lane.b32.xlu0 %v391, 96
    %v394 = vpop.permute.xlu0 %393
    %v396 = vadd.f32 %v385, %v394
    %v397 = vtanh.pop %v396
    %399 = vrot.lane.b32.xlu0 %v397, 64
    %v400 = vpop.permute.xlu0 %399
    %v402 = vmul.f32 %v384, %v400
    %404 = vrot.lane.b32.xlu0 %v402, 96
    %v405 = vpop.permute.xlu0 %404
    %vm407 = vcmask 785920
    %408 = vst.msk [vmem:[#allocation12] sm:$0xff] %vm407, %v405
    %s409 = scalar_lea.vmem [#allocation4], 24
    %v410 = vld [vmem:[%s409] sm:$0xff]
    %411 = vrot.lane.b32.xlu0 %v402, 32
    %v412 = vpop.permute.xlu0 %411
    %v413 = vsel %vm89, %v412, 0
    %415 = vmatprep.subr.mxu0 0.0
    %416 = vmatpush1.msra.mxu0 %v84
    %417 = vmatprep.subr.mxu0 0.0
    %418 = vmatpush1.msra.mxu0 %v85
    %419 = vmatprep.subr.mxu0 0.0
    %420 = vmatpush1.msra.mxu0 %v86
    %421 = vmatprep.subr.mxu0 0.0
    %422 = vmatpush1.msra.mxu0 %v87
    %423 = vmatprep.subr.mxu0 0.0
    %424 = vmatpush1.msra.mxu0 0.0
    %425 = vmatprep.subr.mxu0 0.0
    %426 = vmatpush1.msra.mxu0 0.0
    %427 = vmatprep.subr.mxu0 0.0
    %428 = vmatpush1.msra.mxu0 0.0
    %429 = vmatprep.subr.mxu0 0.0
    %430 = vmatpush1.msra.mxu0 0.0
    %431 = vmatprep.subr.mxu0 0.0
    %432 = vmatpush1.msra.mxu0 0.0
    %433 = vmatprep.subr.mxu0 0.0
    %434 = vmatpush1.msra.mxu0 0.0
    %435 = vmatprep.subr.mxu0 0.0
    %436 = vmatpush1.msra.mxu0 0.0
    %437 = vmatprep.subr.mxu0 0.0
    %438 = vmatpush1.msra.mxu0 0.0
    %439 = vmatprep.subr.mxu0 0.0
    %440 = vmatpush1.msra.mxu0 0.0
    %441 = vmatprep.subr.mxu0 0.0
    %442 = vmatpush1.msra.mxu0 0.0
    %443 = vmatprep.subr.mxu0 0.0
    %444 = vmatpush1.msra.mxu0 0.0
    %445 = vmatprep.subr.mxu0 0.0
    %446 = vmatpush1.msra.mxu0 0.0
    %447 = vmatprep.subr.mxu0 0.0
    %448 = vmatpush1.msra.mxu0 0.0
    %449 = vmatprep.subr.mxu0 0.0
    %450 = vmatpush1.msra.mxu0 0.0
    %451 = vmatprep.subr.mxu0 0.0
    %452 = vmatpush1.msra.mxu0 0.0
    %453 = vmatprep.subr.mxu0 0.0
    %454 = vmatpush1.msra.mxu0 0.0
    %455 = vmatprep.subr.mxu0 0.0
    %456 = vmatpush1.msra.mxu0 0.0
    %457 = vmatprep.subr.mxu0 0.0
    %458 = vmatpush1.msra.mxu0 0.0
    %459 = vmatprep.subr.mxu0 0.0
    %460 = vmatpush1.msra.mxu0 0.0
    %461 = vmatprep.subr.mxu0 0.0
    %462 = vmatpush1.msra.mxu0 0.0
    %463 = vmatprep.subr.mxu0 0.0
    %464 = vmatpush1.msra.mxu0 0.0
    %465 = vmatprep.subr.mxu0 0.0
    %466 = vmatpush1.msra.mxu0 0.0
    %467 = vmatprep.subr.mxu0 0.0
    %468 = vmatpush1.msra.mxu0 0.0
    %469 = vmatprep.subr.mxu0 0.0
    %470 = vmatpush1.msra.mxu0 0.0
    %471 = vmatprep.subr.mxu0 0.0
    %472 = vmatpush1.msra.mxu0 0.0
    %473 = vmatprep.subr.mxu0 0.0
    %474 = vmatpush1.msra.mxu0 0.0
    %475 = vmatprep.subr.mxu0 0.0
    %476 = vmatpush1.msra.mxu0 0.0
    %477 = vmatprep.subr.mxu0 0.0
    %478 = vmatpush1.msra.mxu0 0.0
    %479 = vmatprep.mubr.f32.mxu0 0.0
    %480 = vmatmul.mubr.f32.gmra.mrb[0].mxu0 %v413
    %v481 = vpop.f32.mrb[0].mxu0
    %v482 = vadd.f32 0.0, %v481
    %v483 = vpop.f32.mrb[0].mxu0
    %484 = vdwg.mxu0
    %v485 = vadd.f32 %v410, %v482
    %v486 = vxor.u32 %v485, 2147483648
    %v487 = vmul.f32 %v486, 1.442695
    %v488 = vpow.pop %v487
    %v489 = vadd.f32 %v488, 1.0
    %v490 = vrcp.pop %v489
    %v491 = vmul.f32 1.0, %v490
    %v492 = vmul.f32 %v491, %v396
    %v493 = vtanh.pop %v485
    %495 = vrot.lane.b32.xlu0 %v493, 64
    %v496 = vpop.permute.xlu0 %495
    %v498 = vmul.f32 %v491, %v496
    %500 = vrot.lane.b32.xlu0 %v498, 96
    %v501 = vpop.permute.xlu0 %500
    %v503 = vadd.f32 %v492, %v501
    %v504 = vtanh.pop %v503
    %506 = vrot.lane.b32.xlu0 %v504, 64
    %v507 = vpop.permute.xlu0 %506
    %v509 = vmul.f32 %v491, %v507
    %vm510 = vcmask 1048320
    %511 = vst.msk [vmem:[#allocation12] sm:$0xff] %vm510, %v509
    %s512 = scalar_lea.vmem [#allocation4], 32
    %v513 = vld [vmem:[%s512] sm:$0xff]
    %515 = vrot.lane.b32.xlu0 %v509, 32
    %v516 = vpop.permute.xlu0 %515
    %v517 = vsel %vm89, %v516, 0
    %519 = vmatprep.subr.mxu0 0.0
    %520 = vmatpush1.msra.mxu0 %v84
    %521 = vmatprep.subr.mxu0 0.0
    %522 = vmatpush1.msra.mxu0 %v85
    %523 = vmatprep.subr.mxu0 0.0
    %524 = vmatpush1.msra.mxu0 %v86
    %525 = vmatprep.subr.mxu0 0.0
    %526 = vmatpush1.msra.mxu0 %v87
    %527 = vmatprep.subr.mxu0 0.0
    %528 = vmatpush1.msra.mxu0 0.0
    %529 = vmatprep.subr.mxu0 0.0
    %530 = vmatpush1.msra.mxu0 0.0
    %531 = vmatprep.subr.mxu0 0.0
    %532 = vmatpush1.msra.mxu0 0.0
    %533 = vmatprep.subr.mxu0 0.0
    %534 = vmatpush1.msra.mxu0 0.0
    %535 = vmatprep.subr.mxu0 0.0
    %536 = vmatpush1.msra.mxu0 0.0
    %537 = vmatprep.subr.mxu0 0.0
    %538 = vmatpush1.msra.mxu0 0.0
    %539 = vmatprep.subr.mxu0 0.0
    %540 = vmatpush1.msra.mxu0 0.0
    %541 = vmatprep.subr.mxu0 0.0
    %542 = vmatpush1.msra.mxu0 0.0
    %543 = vmatprep.subr.mxu0 0.0
    %544 = vmatpush1.msra.mxu0 0.0
    %545 = vmatprep.subr.mxu0 0.0
    %546 = vmatpush1.msra.mxu0 0.0
    %547 = vmatprep.subr.mxu0 0.0
    %548 = vmatpush1.msra.mxu0 0.0
    %549 = vmatprep.subr.mxu0 0.0
    %550 = vmatpush1.msra.mxu0 0.0
    %551 = vmatprep.subr.mxu0 0.0
    %552 = vmatpush1.msra.mxu0 0.0
    %553 = vmatprep.subr.mxu0 0.0
    %554 = vmatpush1.msra.mxu0 0.0
    %555 = vmatprep.subr.mxu0 0.0
    %556 = vmatpush1.msra.mxu0 0.0
    %557 = vmatprep.subr.mxu0 0.0
    %558 = vmatpush1.msra.mxu0 0.0
    %559 = vmatprep.subr.mxu0 0.0
    %560 = vmatpush1.msra.mxu0 0.0
    %561 = vmatprep.subr.mxu0 0.0
    %562 = vmatpush1.msra.mxu0 0.0
    %563 = vmatprep.subr.mxu0 0.0
    %564 = vmatpush1.msra.mxu0 0.0
    %565 = vmatprep.subr.mxu0 0.0
    %566 = vmatpush1.msra.mxu0 0.0
    %567 = vmatprep.subr.mxu0 0.0
    %568 = vmatpush1.msra.mxu0 0.0
    %569 = vmatprep.subr.mxu0 0.0
    %570 = vmatpush1.msra.mxu0 0.0
    %571 = vmatprep.subr.mxu0 0.0
    %572 = vmatpush1.msra.mxu0 0.0
    %573 = vmatprep.subr.mxu0 0.0
    %574 = vmatpush1.msra.mxu0 0.0
    %575 = vmatprep.subr.mxu0 0.0
    %576 = vmatpush1.msra.mxu0 0.0
    %577 = vmatprep.subr.mxu0 0.0
    %578 = vmatpush1.msra.mxu0 0.0
    %579 = vmatprep.subr.mxu0 0.0
    %580 = vmatpush1.msra.mxu0 0.0
    %581 = vmatprep.subr.mxu0 0.0
    %582 = vmatpush1.msra.mxu0 0.0
    %583 = vmatprep.mubr.f32.mxu0 0.0
    %584 = vmatmul.mubr.f32.gmra.mrb[0].mxu0 %v517
    %v585 = vpop.f32.mrb[0].mxu0
    %v586 = vadd.f32 0.0, %v585
    %v587 = vpop.f32.mrb[0].mxu0
    %588 = vdwg.mxu0
    %v589 = vadd.f32 %v513, %v586
    %v590 = vxor.u32 %v589, 2147483648
    %v591 = vmul.f32 %v590, 1.442695
    %v592 = vpow.pop %v591
    %v593 = vadd.f32 %v592, 1.0
    %v594 = vrcp.pop %v593
    %v595 = vmul.f32 1.0, %v594
    %v596 = vmul.f32 %v595, %v503
    %v597 = vtanh.pop %v589
    %599 = vrot.lane.b32.xlu0 %v597, 64
    %v600 = vpop.permute.xlu0 %599
    %v602 = vmul.f32 %v595, %v600
    %604 = vrot.lane.b32.xlu0 %v602, 96
    %v605 = vpop.permute.xlu0 %604
    %v607 = vadd.f32 %v596, %v605
    %v608 = vtanh.pop %v607
    %610 = vrot.lane.b32.xlu0 %v608, 64
    %v611 = vpop.permute.xlu0 %610
    %v613 = vmul.f32 %v595, %v611
    %615 = vrot.lane.b32.xlu0 %v613, 32
    %v616 = vpop.permute.xlu0 %615
    %618 = vst.msk [vmem:[#allocation12 + $0x8] sm:$0xff] %vm89, %v616
    %s619 = scalar_lea.vmem [#allocation4], 40
    %v620 = vld [vmem:[%s619] sm:$0xff]
    %v621 = vsel %vm89, %v616, 0
    %623 = vmatprep.subr.mxu0 0.0
    %624 = vmatpush1.msra.mxu0 %v84
    %625 = vmatprep.subr.mxu0 0.0
    %626 = vmatpush1.msra.mxu0 %v85
    %627 = vmatprep.subr.mxu0 0.0
    %628 = vmatpush1.msra.mxu0 %v86
    %629 = vmatprep.subr.mxu0 0.0
    %630 = vmatpush1.msra.mxu0 %v87
    %631 = vmatprep.subr.mxu0 0.0
    %632 = vmatpush1.msra.mxu0 0.0
    %633 = vmatprep.subr.mxu0 0.0
    %634 = vmatpush1.msra.mxu0 0.0
    %635 = vmatprep.subr.mxu0 0.0
    %636 = vmatpush1.msra.mxu0 0.0
    %637 = vmatprep.subr.mxu0 0.0
    %638 = vmatpush1.msra.mxu0 0.0
    %639 = vmatprep.subr.mxu0 0.0
    %640 = vmatpush1.msra.mxu0 0.0
    %641 = vmatprep.subr.mxu0 0.0
    %642 = vmatpush1.msra.mxu0 0.0
    %643 = vmatprep.subr.mxu0 0.0
    %644 = vmatpush1.msra.mxu0 0.0
    %645 = vmatprep.subr.mxu0 0.0
    %646 = vmatpush1.msra.mxu0 0.0
    %647 = vmatprep.subr.mxu0 0.0
    %648 = vmatpush1.msra.mxu0 0.0
    %649 = vmatprep.subr.mxu0 0.0
    %650 = vmatpush1.msra.mxu0 0.0
    %651 = vmatprep.subr.mxu0 0.0
    %652 = vmatpush1.msra.mxu0 0.0
    %653 = vmatprep.subr.mxu0 0.0
    %654 = vmatpush1.msra.mxu0 0.0
    %655 = vmatprep.subr.mxu0 0.0
    %656 = vmatpush1.msra.mxu0 0.0
    %657 = vmatprep.subr.mxu0 0.0
    %658 = vmatpush1.msra.mxu0 0.0
    %659 = vmatprep.subr.mxu0 0.0
    %660 = vmatpush1.msra.mxu0 0.0
    %661 = vmatprep.subr.mxu0 0.0
    %662 = vmatpush1.msra.mxu0 0.0
    %663 = vmatprep.subr.mxu0 0.0
    %664 = vmatpush1.msra.mxu0 0.0
    %665 = vmatprep.subr.mxu0 0.0
    %666 = vmatpush1.msra.mxu0 0.0
    %667 = vmatprep.subr.mxu0 0.0
    %668 = vmatpush1.msra.mxu0 0.0
    %669 = vmatprep.subr.mxu0 0.0
    %670 = vmatpush1.msra.mxu0 0.0
    %671 = vmatprep.subr.mxu0 0.0
    %672 = vmatpush1.msra.mxu0 0.0
    %673 = vmatprep.subr.mxu0 0.0
    %674 = vmatpush1.msra.mxu0 0.0
    %675 = vmatprep.subr.mxu0 0.0
    %676 = vmatpush1.msra.mxu0 0.0
    %677 = vmatprep.subr.mxu0 0.0
    %678 = vmatpush1.msra.mxu0 0.0
    %679 = vmatprep.subr.mxu0 0.0
    %680 = vmatpush1.msra.mxu0 0.0
    %681 = vmatprep.subr.mxu0 0.0
    %682 = vmatpush1.msra.mxu0 0.0
    %683 = vmatprep.subr.mxu0 0.0
    %684 = vmatpush1.msra.mxu0 0.0
    %685 = vmatprep.subr.mxu0 0.0
    %686 = vmatpush1.msra.mxu0 0.0
    %687 = vmatprep.mubr.f32.mxu0 0.0
    %688 = vmatmul.mubr.f32.gmra.mrb[0].mxu0 %v621
    %v689 = vpop.f32.mrb[0].mxu0
    %v690 = vadd.f32 0.0, %v689
    %v691 = vpop.f32.mrb[0].mxu0
    %692 = vdwg.mxu0
    %v693 = vadd.f32 %v620, %v690
    %v694 = vxor.u32 %v693, 2147483648
    %v695 = vmul.f32 %v694, 1.442695
    %v696 = vpow.pop %v695
    %v697 = vadd.f32 %v696, 1.0
    %v698 = vrcp.pop %v697
    %v699 = vmul.f32 1.0, %v698
    %v700 = vmul.f32 %v699, %v607
    %v701 = vtanh.pop %v693
    %703 = vrot.lane.b32.xlu0 %v701, 64
    %v704 = vpop.permute.xlu0 %703
    %v706 = vmul.f32 %v699, %v704
    %708 = vrot.lane.b32.xlu0 %v706, 96
    %v709 = vpop.permute.xlu0 %708
    %v711 = vadd.f32 %v700, %v709
    %v712 = vtanh.pop %v711
    %714 = vrot.lane.b32.xlu0 %v712, 64
    %v715 = vpop.permute.xlu0 %714
    %v717 = vmul.f32 %v699, %v715
    %719 = vrot.lane.b32.xlu0 %v717, 64
    %v720 = vpop.permute.xlu0 %719
    %722 = vst.msk [vmem:[#allocation12 + $0x8] sm:$0xff] %vm300, %v720
    %s723 = scalar_lea.vmem [#allocation4], 48
    %v724 = vld [vmem:[%s723] sm:$0xff]
    %725 = vrot.lane.b32.xlu0 %v717, 32
    %v726 = vpop.permute.xlu0 %725
    %v727 = vsel %vm89, %v726, 0
    %729 = vmatprep.subr.mxu0 0.0
    %730 = vmatpush1.msra.mxu0 %v84
    %731 = vmatprep.subr.mxu0 0.0
    %732 = vmatpush1.msra.mxu0 %v85
    %733 = vmatprep.subr.mxu0 0.0
    %734 = vmatpush1.msra.mxu0 %v86
    %735 = vmatprep.subr.mxu0 0.0
    %736 = vmatpush1.msra.mxu0 %v87
    %737 = vmatprep.subr.mxu0 0.0
    %738 = vmatpush1.msra.mxu0 0.0
    %739 = vmatprep.subr.mxu0 0.0
    %740 = vmatpush1.msra.mxu0 0.0
    %741 = vmatprep.subr.mxu0 0.0
    %742 = vmatpush1.msra.mxu0 0.0
    %743 = vmatprep.subr.mxu0 0.0
    %744 = vmatpush1.msra.mxu0 0.0
    %745 = vmatprep.subr.mxu0 0.0
    %746 = vmatpush1.msra.mxu0 0.0
    %747 = vmatprep.subr.mxu0 0.0
    %748 = vmatpush1.msra.mxu0 0.0
    %749 = vmatprep.subr.mxu0 0.0
    %750 = vmatpush1.msra.mxu0 0.0
    %751 = vmatprep.subr.mxu0 0.0
    %752 = vmatpush1.msra.mxu0 0.0
    %753 = vmatprep.subr.mxu0 0.0
    %754 = vmatpush1.msra.mxu0 0.0
    %755 = vmatprep.subr.mxu0 0.0
    %756 = vmatpush1.msra.mxu0 0.0
    %757 = vmatprep.subr.mxu0 0.0
    %758 = vmatpush1.msra.mxu0 0.0
    %759 = vmatprep.subr.mxu0 0.0
    %760 = vmatpush1.msra.mxu0 0.0
    %761 = vmatprep.subr.mxu0 0.0
    %762 = vmatpush1.msra.mxu0 0.0
    %763 = vmatprep.subr.mxu0 0.0
    %764 = vmatpush1.msra.mxu0 0.0
    %765 = vmatprep.subr.mxu0 0.0
    %766 = vmatpush1.msra.mxu0 0.0
    %767 = vmatprep.subr.mxu0 0.0
    %768 = vmatpush1.msra.mxu0 0.0
    %769 = vmatprep.subr.mxu0 0.0
    %770 = vmatpush1.msra.mxu0 0.0
    %771 = vmatprep.subr.mxu0 0.0
    %772 = vmatpush1.msra.mxu0 0.0
    %773 = vmatprep.subr.mxu0 0.0
    %774 = vmatpush1.msra.mxu0 0.0
    %775 = vmatprep.subr.mxu0 0.0
    %776 = vmatpush1.msra.mxu0 0.0
    %777 = vmatprep.subr.mxu0 0.0
    %778 = vmatpush1.msra.mxu0 0.0
    %779 = vmatprep.subr.mxu0 0.0
    %780 = vmatpush1.msra.mxu0 0.0
    %781 = vmatprep.subr.mxu0 0.0
    %782 = vmatpush1.msra.mxu0 0.0
    %783 = vmatprep.subr.mxu0 0.0
    %784 = vmatpush1.msra.mxu0 0.0
    %785 = vmatprep.subr.mxu0 0.0
    %786 = vmatpush1.msra.mxu0 0.0
    %787 = vmatprep.subr.mxu0 0.0
    %788 = vmatpush1.msra.mxu0 0.0
    %789 = vmatprep.subr.mxu0 0.0
    %790 = vmatpush1.msra.mxu0 0.0
    %791 = vmatprep.subr.mxu0 0.0
    %792 = vmatpush1.msra.mxu0 0.0
    %793 = vmatprep.mubr.f32.mxu0 0.0
    %794 = vmatmul.mubr.f32.gmra.mrb[0].mxu0 %v727
    %v795 = vpop.f32.mrb[0].mxu0
    %v796 = vadd.f32 0.0, %v795
    %v797 = vpop.f32.mrb[0].mxu0
    %798 = vdwg.mxu0
    %v799 = vadd.f32 %v724, %v796
    %v800 = vxor.u32 %v799, 2147483648
    %v801 = vmul.f32 %v800, 1.442695
    %v802 = vpow.pop %v801
    %v803 = vadd.f32 %v802, 1.0
    %v804 = vrcp.pop %v803
    %v805 = vmul.f32 1.0, %v804
    %v806 = vmul.f32 %v805, %v711
    %v807 = vtanh.pop %v799
    %809 = vrot.lane.b32.xlu0 %v807, 64
    %v810 = vpop.permute.xlu0 %809
    %v812 = vmul.f32 %v805, %v810
    %814 = vrot.lane.b32.xlu0 %v812, 96
    %v815 = vpop.permute.xlu0 %814
    %v817 = vadd.f32 %v806, %v815
    %v818 = vtanh.pop %v817
    %820 = vrot.lane.b32.xlu0 %v818, 64
    %v821 = vpop.permute.xlu0 %820
    %v823 = vmul.f32 %v805, %v821
    %825 = vrot.lane.b32.xlu0 %v823, 96
    %v826 = vpop.permute.xlu0 %825
    %828 = vst.msk [vmem:[#allocation12 + $0x8] sm:$0xff] %vm407, %v826
    %s829 = scalar_lea.vmem [#allocation4], 56
    %v830 = vld [vmem:[%s829] sm:$0xff]
    %831 = vrot.lane.b32.xlu0 %v823, 32
    %v832 = vpop.permute.xlu0 %831
    %v833 = vsel %vm89, %v832, 0
    %835 = vmatprep.subr.mxu0 0.0
    %836 = vmatpush1.msra.mxu0 %v84
    %837 = vmatprep.subr.mxu0 0.0
    %838 = vmatpush1.msra.mxu0 %v85
    %839 = vmatprep.subr.mxu0 0.0
    %840 = vmatpush1.msra.mxu0 %v86
    %841 = vmatprep.subr.mxu0 0.0
    %842 = vmatpush1.msra.mxu0 %v87
    %843 = vmatprep.subr.mxu0 0.0
    %844 = vmatpush1.msra.mxu0 0.0
    %845 = vmatprep.subr.mxu0 0.0
    %846 = vmatpush1.msra.mxu0 0.0
    %847 = vmatprep.subr.mxu0 0.0
    %848 = vmatpush1.msra.mxu0 0.0
    %849 = vmatprep.subr.mxu0 0.0
    %850 = vmatpush1.msra.mxu0 0.0
    %851 = vmatprep.subr.mxu0 0.0
    %852 = vmatpush1.msra.mxu0 0.0
    %853 = vmatprep.subr.mxu0 0.0
    %854 = vmatpush1.msra.mxu0 0.0
    %855 = vmatprep.subr.mxu0 0.0
    %856 = vmatpush1.msra.mxu0 0.0
    %857 = vmatprep.subr.mxu0 0.0
    %858 = vmatpush1.msra.mxu0 0.0
    %859 = vmatprep.subr.mxu0 0.0
    %860 = vmatpush1.msra.mxu0 0.0
    %861 = vmatprep.subr.mxu0 0.0
    %862 = vmatpush1.msra.mxu0 0.0
    %863 = vmatprep.subr.mxu0 0.0
    %864 = vmatpush1.msra.mxu0 0.0
    %865 = vmatprep.subr.mxu0 0.0
    %866 = vmatpush1.msra.mxu0 0.0
    %867 = vmatprep.subr.mxu0 0.0
    %868 = vmatpush1.msra.mxu0 0.0
    %869 = vmatprep.subr.mxu0 0.0
    %870 = vmatpush1.msra.mxu0 0.0
    %871 = vmatprep.subr.mxu0 0.0
    %872 = vmatpush1.msra.mxu0 0.0
    %873 = vmatprep.subr.mxu0 0.0
    %874 = vmatpush1.msra.mxu0 0.0
    %875 = vmatprep.subr.mxu0 0.0
    %876 = vmatpush1.msra.mxu0 0.0
    %877 = vmatprep.subr.mxu0 0.0
    %878 = vmatpush1.msra.mxu0 0.0
    %879 = vmatprep.subr.mxu0 0.0
    %880 = vmatpush1.msra.mxu0 0.0
    %881 = vmatprep.subr.mxu0 0.0
    %882 = vmatpush1.msra.mxu0 0.0
    %883 = vmatprep.subr.mxu0 0.0
    %884 = vmatpush1.msra.mxu0 0.0
    %885 = vmatprep.subr.mxu0 0.0
    %886 = vmatpush1.msra.mxu0 0.0
    %887 = vmatprep.subr.mxu0 0.0
    %888 = vmatpush1.msra.mxu0 0.0
    %889 = vmatprep.subr.mxu0 0.0
    %890 = vmatpush1.msra.mxu0 0.0
    %891 = vmatprep.subr.mxu0 0.0
    %892 = vmatpush1.msra.mxu0 0.0
    %893 = vmatprep.subr.mxu0 0.0
    %894 = vmatpush1.msra.mxu0 0.0
    %895 = vmatprep.subr.mxu0 0.0
    %896 = vmatpush1.msra.mxu0 0.0
    %897 = vmatprep.subr.mxu0 0.0
    %898 = vmatpush1.msra.mxu0 0.0
    %899 = vmatprep.mubr.f32.mxu0 0.0
    %900 = vmatmul.mubr.f32.gmra.mrb[0].mxu0 %v833
    %v901 = vpop.f32.mrb[0].mxu0
    %v902 = vadd.f32 0.0, %v901
    %v903 = vpop.f32.mrb[0].mxu0
    %904 = vdwg.mxu0
    %v905 = vadd.f32 %v830, %v902
    %v906 = vxor.u32 %v905, 2147483648
    %v907 = vmul.f32 %v906, 1.442695
    %v908 = vpow.pop %v907
    %v909 = vadd.f32 %v908, 1.0
    %v910 = vrcp.pop %v909
    %v911 = vmul.f32 1.0, %v910
    %v912 = vmul.f32 %v911, %v817
    %v913 = vtanh.pop %v905
    %915 = vrot.lane.b32.xlu0 %v913, 64
    %v916 = vpop.permute.xlu0 %915
    %v918 = vmul.f32 %v911, %v916
    %920 = vrot.lane.b32.xlu0 %v918, 96
    %v921 = vpop.permute.xlu0 %920
    %v923 = vadd.f32 %v912, %v921
    %v924 = vtanh.pop %v923
    %926 = vrot.lane.b32.xlu0 %v924, 64
    %v927 = vpop.permute.xlu0 %926
    %v929 = vmul.f32 %v911, %v927
    %930 = vst.msk [vmem:[#allocation12 + $0x8] sm:$0xff] %vm510, %v929
    %932 = vrot.lane.b32.xlu0 %v929, 32
    %v933 = vpop.permute.xlu0 %932
    %935 = vst.msk [vmem:[#allocation2] sm:$0xff] %vm89, %v933
    %937 = vrot.lane.b32.xlu0 %v923, 96
    %v938 = vpop.permute.xlu0 %937
    %940 = vst.msk [vmem:[#allocation3] sm:$0xff] %vm89, %v938
    // Predicated region
    $region38: #{tpu_custom_call.1} parent=1 // pred_check
      %p941 = pneg %p73
    $region39: #{tpu_custom_call.1} parent=1 // pred_check_branch
      %943 = sbr.rel (%p941) target = $region41
    $region40: #{tpu_custom_call.1} parent=1 // pred_region
      %944 = vst.msk [vmem:[#allocation13] sm:$0xff] %vm89, %v933
      %945 = vst.msk [vmem:[#allocation15] sm:$0xff] %vm89, %v938
    $region41: #{tpu_custom_call.1} parent=1 // pred_fallthru
      _
    // Predicated region
    $region42: #{tpu_custom_call.1} parent=1 // pred_check
      _
    $region43: #{tpu_custom_call.1} parent=1 // pred_check_branch
      %947 = sbr.rel (0) target = $region45
    $region44: #{tpu_custom_call.1} parent=1 // pred_region
      %s949 = ssub.s32 256, 256
      %950 = vsyncadd [#allocation6], %s949
      %s952 = sshll.u32 [#allocation12], 4
      %s953 = int_to_ptr.vmem [resolvable:$true] %s952
      %955 = dma.vmem_to_hbm [thread:$0]  %s953, 256, %s4, [#allocation6]
    $region45: #{tpu_custom_call.1} parent=1 // pred_fallthru
      _
    // Predicated region
    $region46: #{tpu_custom_call.1} parent=1 // pred_check
      _
    $region47: #{tpu_custom_call.1} parent=1 // pred_check_branch
      %957 = sbr.rel (0) target = $region49
    $region48: #{tpu_custom_call.1} parent=1 // pred_region
      %s959 = ssub.s32 128, 128
      %960 = vsyncadd [#allocation14], %s959
      %s962 = sshll.u32 [#allocation13], 4
      %s963 = int_to_ptr.vmem [resolvable:$true] %s962
      %965 = dma.vmem_to_hbm [thread:$0]  %s963, 128, %s5, [#allocation14]
    $region49: #{tpu_custom_call.1} parent=1 // pred_fallthru
      _
    // Predicated region
    $region50: #{tpu_custom_call.1} parent=1 // pred_check
      _
    $region51: #{tpu_custom_call.1} parent=1 // pred_check_branch
      %967 = sbr.rel (0) target = $region53
    $region52: #{tpu_custom_call.1} parent=1 // pred_region
      %s969 = ssub.s32 128, 128
      %970 = vsyncadd [#allocation14], %s969
      %s972 = sshll.u32 [#allocation15], 4
      %s973 = int_to_ptr.vmem [resolvable:$true] %s972
      %975 = dma.vmem_to_hbm [thread:$0]  %s973, 128, %s6, [#allocation14]
    $region53: #{tpu_custom_call.1} parent=1 // pred_fallthru
      _
    // Predicated region
    $region54: #{tpu_custom_call.1} parent=1 // pred_check
      _
    $region55: #{tpu_custom_call.1} parent=1 // pred_check_branch
      %977 = sbr.rel (0) target = $region57
    $region56: #{tpu_custom_call.1} parent=1 // pred_region
      %978 = dma.done [#allocation6], 256
    $region57: #{tpu_custom_call.1} parent=1 // pred_fallthru
      _
    // Predicated region
    $region58: #{tpu_custom_call.1} parent=1 // pred_check
      _
    $region59: #{tpu_custom_call.1} parent=1 // pred_check_branch
      %980 = sbr.rel (0) target = $region61
    $region60: #{tpu_custom_call.1} parent=1 // pred_region
      %981 = dma.done [#allocation14], 128
    $region61: #{tpu_custom_call.1} parent=1 // pred_fallthru
      _
    // Predicated region
    $region62: #{tpu_custom_call.1} parent=1 // pred_check
      _
    $region63: #{tpu_custom_call.1} parent=1 // pred_check_branch
      %983 = sbr.rel (0) target = $region65
    $region64: #{tpu_custom_call.1} parent=1 // pred_region
      %984 = dma.done [#allocation14], 128
    $region65: #{tpu_custom_call.1} parent=1 // pred_fallthru
      _
    %985 = vsyncpa [#allocation5], 1
    %986 = vsyncpa [#allocation8], 1
    %987 = vsyncpa [#allocation11], 1
    %988 = vsyncpa [#allocation6], 1
    %989 = vsyncpa [#allocation14], 1

</llo_original>
